<compile_context>
chip_gen: v5e
topology: v5e:2x2
jax: 0.10.0
libtpu: 0.0.40
codegen_flags: <defaults>
</compile_context>

<pallas_src>
import functools

import jax
import jax.numpy as jnp
from jax.experimental import pallas as pl
from jax.experimental.pallas import tpu as pltpu

# ---------------- config (small shapes consistent with the module) ----------------
WORLD_STATE_SIZE = 43          # 35 numeric + 8 categorical features (see CAT_FLAGS)
NUM_NUMERIC = 35
NUM_ACTIONS = 16
ACTION_DIM = 8
INNER_DIM = 64                 # must be >= WORLD_STATE_SIZE + ACTION_DIM
PROJ_DIM = INNER_DIM - ACTION_DIM   # 56
HIDDEN_DIM = 32
N_LSTM_LAYERS = 2              # kernel below statically encodes exactly 2 layers
B, S = 2, 8

# ModelDataProvider.world_state_categorial_flags(): the 8 categorical flags are placed as
# the last 8 world-state features here (synthetic, deterministic choice).
CAT_FLAGS = [False] * NUM_NUMERIC + [True] * (WORLD_STATE_SIZE - NUM_NUMERIC)
assert len(CAT_FLAGS) == WORLD_STATE_SIZE
assert N_LSTM_LAYERS == 2


# ---------------- fused Pallas kernel ----------------
def _fused_kernel(act_idx_ref,                       # SMEM (B, S) int32 [scalar prefetch]
                  x_ref, w_in_ref, b_in_ref,
                  wih0x_ref, bl0_ref, act_tbl_ref,
                  wblk_ref, bl1_ref,
                  wp1_ref, bp1_ref, wp2_ref, bp2_ref,
                  out_ref, hT_ref, cT_ref,
                  pre_ref,                           # VMEM scratch (S, B, 4H) f32
                  *, batch, seq, hidden):
    H = hidden
    H4 = 4 * H
    f32 = jnp.float32
    bf16 = jnp.bfloat16

    # ---- phase 1: in_proj (Linear+ReLU) and layer-0 input-gate precompute for ALL S*B rows
    # in one MXU pass each, batch-major straight from the (B, S, WS) input (no host reshape).
    x = x_ref[...].reshape(batch * seq, WORLD_STATE_SIZE).astype(bf16)
    proj = jax.nn.relu(
        jnp.dot(x, w_in_ref[...], preferred_element_type=f32) + b_in_ref[...])
    pre = (jnp.dot(proj.astype(bf16), wih0x_ref[...], preferred_element_type=f32)
           + bl0_ref[...])                                           # (B*S, 4H), row = b*S+s

    # Folded action-embedding contribution: gather one (1, 4H) row per (b, s) from the
    # precomputed act_tbl = emb_table @ W_ih0[action rows] using SMEM-prefetched indices.
    rows = []
    for b in range(batch):
        for s in range(seq):
            a = act_idx_ref[b, s]
            rows.append(act_tbl_ref[pl.ds(a, 1), :])                 # dynamic-row load
    pre = pre + jnp.concatenate(rows, axis=0)                        # (B*S, 4H)

    # One small relayout to time-major, parked in VMEM scratch -> clean pre_ref[t] reads.
    pre_ref[...] = jnp.swapaxes(pre.reshape(batch, seq, H4), 0, 1)   # (S, B, 4H)

    # ---- gate nonlinearity: single tanh pass per gate slab; sigmoid(z)=0.5*tanh(z/2)+0.5.
    col = jax.lax.broadcasted_iota(jnp.int32, (1, H4), 1)
    is_g = jnp.logical_and(col >= 2 * H, col < 3 * H)
    gate_scale = jnp.where(is_g, 1.0, 0.5).astype(f32)               # 0.5 for i/f/o, 1.0 for g

    def cell(gates, c_prev):
        t_all = jnp.tanh(gates * gate_scale)                         # one EUP pass over (B,4H)
        i_g = t_all[:, 0 * H:1 * H] * 0.5 + 0.5
        f_g = t_all[:, 1 * H:2 * H] * 0.5 + 0.5
        g_g = t_all[:, 2 * H:3 * H]
        o_g = t_all[:, 3 * H:4 * H] * 0.5 + 0.5
        c_new = f_g * c_prev + i_g * g_g
        h_new = o_g * jnp.tanh(c_new)
        return h_new, c_new

    wblk = wblk_ref[...]                                             # (2H, 8H) bf16
    bl1 = bl1_ref[...]                                               # (1, 4H) f32

    h0 = jnp.zeros((batch, H), f32)
    c0 = jnp.zeros((batch, H), f32)
    h1 = jnp.zeros((batch, H), f32)
    c1 = jnp.zeros((batch, H), f32)

    # ---- phase 2: skewed (wavefront) recurrence. Wave w runs layer0 at t=w and layer1 at
    # t=w-1; both consume only h0(w-1)/h1(w-2), so ONE (B,2H)x(2H,8H) bf16 dot per wave.
    h0, c0 = cell(pre_ref[0], c0)                                    # wave 0: layer0 t=0
    for w in range(1, seq + 1):                                      # static unroll, S waves
        hin = jnp.concatenate([h0, h1], axis=1).astype(bf16)         # [h0(w-1) | h1(w-2)]
        g_all = jnp.dot(hin, wblk, preferred_element_type=f32)       # (B, 8H)
        if w < seq:
            h0_new, c0 = cell(g_all[:, :H4] + pre_ref[w], c0)        # layer0, t = w
        else:
            h0_new = h0
        h1, c1 = cell(g_all[:, H4:] + bl1, c1)                       # layer1, t = w-1
        h0 = h0_new

    # ---- phase 3: out_projector on the LAST timestep only; sigmoid on categorical columns.
    hm = jax.nn.relu(
        jnp.dot(h1.astype(bf16), wp1_ref[...], preferred_element_type=f32) + bp1_ref[...])
    y = jnp.dot(hm.astype(bf16), wp2_ref[...], preferred_element_type=f32) + bp2_ref[...]
    ocol = jax.lax.broadcasted_iota(jnp.int32, y.shape, 1)
    out_ref[...] = jnp.where(ocol >= NUM_NUMERIC, 0.5 * jnp.tanh(0.5 * y) + 0.5, y)

    hT_ref[0] = h0
    hT_ref[1] = h1
    cT_ref[0] = c0
    cT_ref[1] = c1


def _full_spec(shape):
    zeros = (0,) * len(shape)
    # index_map receives (grid_idx, scalar_prefetch_ref); whole array is one block.
    return pl.BlockSpec(shape, lambda i, a, _z=zeros: _z)


def state_predictor_fused(params, world_states, action_indices, *, batch, seq):
    H4 = 4 * HIDDEN_DIM
    kernel = functools.partial(_fused_kernel, batch=batch, seq=seq, hidden=HIDDEN_DIM)
    out_shapes = (
        jax.ShapeDtypeStruct((batch, WORLD_STATE_SIZE), jnp.float32),            # last-step output
        jax.ShapeDtypeStruct((N_LSTM_LAYERS, batch, HIDDEN_DIM), jnp.float32),   # final hidden
        jax.ShapeDtypeStruct((N_LSTM_LAYERS, batch, HIDDEN_DIM), jnp.float32),   # final cell
    )
    tensor_args = (world_states,
                   params["w_in_bf16"], params["b_in"],
                   params["wih0x_bf16"], params["bl0"], params["act_tbl"],
                   params["wblk_bf16"], params["bl1"],
                   params["w_p1_bf16"], params["b_p1"],
                   params["w_p2_bf16"], params["b_p2"])
    grid_spec = pltpu.PrefetchScalarGridSpec(
        num_scalar_prefetch=1,                       # action indices -> SMEM
        grid=(1,),                                   # single invocation; everything VMEM-resident
        in_specs=[_full_spec(a.shape) for a in tensor_args],
        out_specs=tuple(_full_spec(s.shape) for s in out_shapes),
        scratch_shapes=[pltpu.VMEM((seq, batch, H4), jnp.float32)],  # time-major pre-gates
    )
    return pl.pallas_call(
        kernel,
        out_shape=out_shapes,
        grid_spec=grid_spec,
        compiler_params=pltpu.CompilerParams(dimension_semantics=("arbitrary",)),
    )(action_indices, *tensor_args)


# ---------------- parameter construction (deterministic, synthetic) ----------------
def make_params(key):
    ks = jax.random.split(key, 8)
    H = HIDDEN_DIM
    H4 = 4 * H

    def xavier(k, shape):
        limit = jnp.sqrt(6.0 / (shape[0] + shape[1]))
        return jax.random.uniform(k, shape, jnp.float32, -limit, limit)

    def bias(k, n):
        return jax.random.uniform(k, (1, n), jnp.float32, -0.005, 0.005)

    # LSTM weights stored transposed relative to torch ((in, 4H)); combined bias = b_ih + b_hh.
    lk = jax.random.split(ks[7], 8)
    wih0 = xavier(lk[0], (INNER_DIM, H4))
    whh0 = xavier(lk[1], (H, H4))
    bl0 = (jax.random.uniform(lk[2], (1, H4), jnp.float32, -0.005, 0.005)
           + jax.random.uniform(lk[3], (1, H4), jnp.float32, -0.005, 0.005))
    wih1 = xavier(lk[4], (H, H4))
    whh1 = xavier(lk[5], (H, H4))
    bl1 = (jax.random.uniform(lk[6], (1, H4), jnp.float32, -0.005, 0.005)
           + jax.random.uniform(lk[7], (1, H4), jnp.float32, -0.005, 0.005))

    p = {
        "emb": jax.random.normal(ks[0], (NUM_ACTIONS, ACTION_DIM), jnp.float32),
        # in_proj Linear (stored (in, out), i.e. torch weight transposed)
        "w_in": xavier(ks[1], (WORLD_STATE_SIZE, PROJ_DIM)),
        "b_in": bias(ks[2], PROJ_DIM),
        # layer-0 W_ih split into world-state-proj rows and action-embedding rows
        "wih0_x": wih0[:PROJ_DIM, :],
        "wih0_a": wih0[PROJ_DIM:, :],
        "whh0": whh0, "bl0": bl0,
        "wih1": wih1, "whh1": whh1, "bl1": bl1,
        # out_projector
        "w_p1": xavier(ks[3], (H, 2 * H)),
        "b_p1": bias(ks[4], 2 * H),
        "w_p2": xavier(ks[5], (2 * H, WORLD_STATE_SIZE)),
        "b_p2": bias(ks[6], WORLD_STATE_SIZE),
    }

    # ---- kernel-layout / folded parameters (inference-time weight transforms) ----
    # Action-embedding lookup folded into a per-action gate-contribution table.
    p["act_tbl"] = p["emb"] @ p["wih0_a"]                            # (NUM_ACTIONS, 4H) f32
    # Wavefront block weight: [h0 | h1] @ [[whh0, wih1], [0, whh1]] -> [gates0 | gates1].
    wblk = jnp.zeros((2 * H, 2 * H4), jnp.float32)
    wblk = wblk.at[:H, :H4].set(p["whh0"])
    wblk = wblk.at[:H, H4:].set(p["wih1"])
    wblk = wblk.at[H:, H4:].set(p["whh1"])
    p["wblk_bf16"] = wblk.astype(jnp.bfloat16)
    # bf16 copies of all matmul weights (f32 accumulation in-kernel).
    p["w_in_bf16"] = p["w_in"].astype(jnp.bfloat16)
    p["wih0x_bf16"] = p["wih0_x"].astype(jnp.bfloat16)
    p["w_p1_bf16"] = p["w_p1"].astype(jnp.bfloat16)
    p["w_p2_bf16"] = p["w_p2"].astype(jnp.bfloat16)
    return p


# ---------------- full forward: a single pallas_call, no host-side glue ops ----------------
def state_predictor_forward(params, world_states, action_indices):
    bsz, seq, _ = world_states.shape
    out, hT, cT = state_predictor_fused(params, world_states, action_indices,
                                        batch=bsz, seq=seq)
    # output = output[:, -1, :] (inference path); final (hidden, cell) returned too
    return out, (hT, cT)


# ---------------- pure-JAX f32 reference (for correctness check) ----------------
def reference_forward(params, world_states, action_indices):
    bsz, seq, _ = world_states.shape
    H = HIDDEN_DIM
    emb = jnp.take(params["emb"], action_indices, axis=0)
    proj = jax.nn.relu(world_states @ params["w_in"] + params["b_in"][0])
    x = jnp.concatenate([proj, emb], axis=-1)                              # (B, S, inner)
    wih0 = jnp.concatenate([params["wih0_x"], params["wih0_a"]], axis=0)
    layers = [(wih0, params["whh0"], params["bl0"][0]),
              (params["wih1"], params["whh1"], params["bl1"][0])]
    h = [jnp.zeros((bsz, H), jnp.float32) for _ in range(N_LSTM_LAYERS)]
    c = [jnp.zeros((bsz, H), jnp.float32) for _ in range(N_LSTM_LAYERS)]
    last = None
    for t in range(seq):
        layer_in = x[:, t, :]
        for l, (wih, whh, bl) in enumerate(layers):
            gates = layer_in @ wih + h[l] @ whh + bl
            i_g = jax.nn.sigmoid(gates[:, 0 * H:1 * H])
            f_g = jax.nn.sigmoid(gates[:, 1 * H:2 * H])
            g_g = jnp.tanh(gates[:, 2 * H:3 * H])
            o_g = jax.nn.sigmoid(gates[:, 3 * H:4 * H])
            c[l] = f_g * c[l] + i_g * g_g
            h[l] = o_g * jnp.tanh(c[l])
            layer_in = h[l]
        last = layer_in
    y = jax.nn.relu(last @ params["w_p1"] + params["b_p1"][0]) @ params["w_p2"] + params["b_p2"][0]
    y = jnp.where(jnp.asarray(CAT_FLAGS), jax.nn.sigmoid(y), y)
    return y, (jnp.stack(h), jnp.stack(c))


if __name__ == "__main__":
    key = jax.random.PRNGKey(0)
    k_p, k_w, k_a = jax.random.split(key, 3)
    params = make_params(k_p)

    world_states = jax.random.normal(k_w, (B, S, WORLD_STATE_SIZE), jnp.float32)
    action_indices = jax.random.randint(k_a, (B, S), 0, NUM_ACTIONS, jnp.int32)

    out, (hT, cT) = state_predictor_forward(params, world_states, action_indices)
    out = jax.block_until_ready(out)
    hT = jax.block_until_ready(hT)
    cT = jax.block_until_ready(cT)

    ref_out, (ref_h, ref_c) = reference_forward(params, world_states, action_indices)
    assert out.shape == (B, WORLD_STATE_SIZE)
    # Tolerance 1e-2: kernel feeds the MXU bf16 inputs (f32 accumulation) and uses the
    # tanh-form sigmoid; both are small-rounding changes vs the pure-f32 reference.
    assert jnp.allclose(out, ref_out, atol=1e-2, rtol=1e-2), "output mismatch"
    assert jnp.allclose(hT, ref_h, atol=1e-2, rtol=1e-2), "hidden-state mismatch"
    assert jnp.allclose(cT, ref_c, atol=1e-2, rtol=1e-2), "cell-state mismatch"

    # TODO(synk): return_losses=True branch (MSE/BCE loss dict + scaling) not implemented.
    # TODO(synk): prev_rnn_hidden != None path not kernelized (h0/c0 are zero-init in-kernel).
    print("KERNEL_OK")
</pallas_src>

<mosaic_0001>
module attributes {stable_mosaic.version = 11 : i64} {
  func.func @_fused_kernel(%arg0: i32, %arg1: memref<2x8xi32, #tpu.memory_space<smem>>, %arg2: memref<2x8x43xf32, #tpu.memory_space<vmem>>, %arg3: memref<43x56xbf16, #tpu.memory_space<vmem>>, %arg4: memref<1x56xf32, #tpu.memory_space<vmem>>, %arg5: memref<56x128xbf16, #tpu.memory_space<vmem>>, %arg6: memref<1x128xf32, #tpu.memory_space<vmem>>, %arg7: memref<16x128xf32, #tpu.memory_space<vmem>>, %arg8: memref<64x256xbf16, #tpu.memory_space<vmem>>, %arg9: memref<1x128xf32, #tpu.memory_space<vmem>>, %arg10: memref<32x64xbf16, #tpu.memory_space<vmem>>, %arg11: memref<1x64xf32, #tpu.memory_space<vmem>>, %arg12: memref<64x43xbf16, #tpu.memory_space<vmem>>, %arg13: memref<1x43xf32, #tpu.memory_space<vmem>>, %arg14: memref<2x43xf32, #tpu.memory_space<vmem>>, %arg15: memref<2x2x32xf32, #tpu.memory_space<vmem>>, %arg16: memref<2x2x32xf32, #tpu.memory_space<vmem>>, %arg17: memref<8x2x128xf32, #tpu.memory_space<vmem>>) attributes {dimension_semantics = [#tpu.dimension_semantics<arbitrary>], iteration_bounds = array<i64: 1>, scalar_prefetch = 1 : i64, scratch_operands = 1 : i64, tpu.core_type = #tpu.core_type<tc>, window_params = [{pipeline_mode = #tpu.pipeline_mode<synchronous>, transform_indices = @transform_0, window_bounds = array<i64: 2, 8, 43>}, {pipeline_mode = #tpu.pipeline_mode<synchronous>, transform_indices = @transform_1, window_bounds = array<i64: 43, 56>}, {pipeline_mode = #tpu.pipeline_mode<synchronous>, transform_indices = @transform_2, window_bounds = array<i64: 1, 56>}, {pipeline_mode = #tpu.pipeline_mode<synchronous>, transform_indices = @transform_3, window_bounds = array<i64: 56, 128>}, {pipeline_mode = #tpu.pipeline_mode<synchronous>, transform_indices = @transform_4, window_bounds = array<i64: 1, 128>}, {pipeline_mode = #tpu.pipeline_mode<synchronous>, transform_indices = @transform_5, window_bounds = array<i64: 16, 128>}, {pipeline_mode = #tpu.pipeline_mode<synchronous>, transform_indices = @transform_6, window_bounds = array<i64: 64, 256>}, {pipeline_mode = #tpu.pipeline_mode<synchronous>, transform_indices = @transform_7, window_bounds = array<i64: 1, 128>}, {pipeline_mode = #tpu.pipeline_mode<synchronous>, transform_indices = @transform_8, window_bounds = array<i64: 32, 64>}, {pipeline_mode = #tpu.pipeline_mode<synchronous>, transform_indices = @transform_9, window_bounds = array<i64: 1, 64>}, {pipeline_mode = #tpu.pipeline_mode<synchronous>, transform_indices = @transform_10, window_bounds = array<i64: 64, 43>}, {pipeline_mode = #tpu.pipeline_mode<synchronous>, transform_indices = @transform_11, window_bounds = array<i64: 1, 43>}, {pipeline_mode = #tpu.pipeline_mode<synchronous>, transform_indices = @transform_12, window_bounds = array<i64: 2, 43>}, {pipeline_mode = #tpu.pipeline_mode<synchronous>, transform_indices = @transform_13, window_bounds = array<i64: 2, 2, 32>}, {pipeline_mode = #tpu.pipeline_mode<synchronous>, transform_indices = @transform_14, window_bounds = array<i64: 2, 2, 32>}]} {
    %c0 = arith.constant 0 : index
    %c0_0 = arith.constant 0 : index
    %c0_1 = arith.constant 0 : index
    %0 = vector.load %arg2[%c0, %c0_0, %c0_1] : memref<2x8x43xf32, #tpu.memory_space<vmem>>, vector<2x8x43xf32>
    %1 = vector.shape_cast %0 : vector<2x8x43xf32> to vector<16x43xf32>
    %2 = arith.truncf %1 : vector<16x43xf32> to vector<16x43xbf16>
    %c0_2 = arith.constant 0 : index
    %c0_3 = arith.constant 0 : index
    %3 = vector.load %arg3[%c0_2, %c0_3] : memref<43x56xbf16, #tpu.memory_space<vmem>>, vector<43x56xbf16>
    %cst = arith.constant dense<0.000000e+00> : vector<16x56xf32>
    %4 = tpu.matmul %2, %3, %cst {dimension_numbers = #tpu.dot_dimension_numbers<[1], [0], [0], [1], [0, 0, 1, 1], [], []>} : vector<16x43xbf16>, vector<43x56xbf16>, vector<16x56xf32> -> vector<16x56xf32>
    %c0_4 = arith.constant 0 : index
    %c0_5 = arith.constant 0 : index
    %5 = vector.load %arg4[%c0_4, %c0_5] : memref<1x56xf32, #tpu.memory_space<vmem>>, vector<1x56xf32>
    %6 = vector.broadcast %5 : vector<1x56xf32> to vector<16x56xf32>
    %7 = arith.addf %4, %6 : vector<16x56xf32>
    %cst_6 = arith.constant 0.000000e+00 : f32
    %8 = vector.broadcast %cst_6 : f32 to vector<16x56xf32>
    %9 = arith.maximumf %7, %8 : vector<16x56xf32>
    %10 = arith.truncf %9 : vector<16x56xf32> to vector<16x56xbf16>
    %c0_7 = arith.constant 0 : index
    %c0_8 = arith.constant 0 : index
    %11 = vector.load %arg5[%c0_7, %c0_8] : memref<56x128xbf16, #tpu.memory_space<vmem>>, vector<56x128xbf16>
    %cst_9 = arith.constant dense<0.000000e+00> : vector<16x128xf32>
    %12 = tpu.matmul %10, %11, %cst_9 {dimension_numbers = #tpu.dot_dimension_numbers<[1], [0], [0], [1], [0, 0, 1, 1], [], []>} : vector<16x56xbf16>, vector<56x128xbf16>, vector<16x128xf32> -> vector<16x128xf32>
    %c0_10 = arith.constant 0 : index
    %c0_11 = arith.constant 0 : index
    %13 = vector.load %arg6[%c0_10, %c0_11] : memref<1x128xf32, #tpu.memory_space<vmem>>, vector<1x128xf32>
    %14 = vector.broadcast %13 : vector<1x128xf32> to vector<16x128xf32>
    %15 = arith.addf %12, %14 : vector<16x128xf32>
    %c0_12 = arith.constant 0 : index
    %c0_13 = arith.constant 0 : index
    %16 = memref.load %arg1[%c0_12, %c0_13] : memref<2x8xi32, #tpu.memory_space<smem>>
    %17 = arith.index_cast %16 : i32 to index
    %c0_14 = arith.constant 0 : index
    %18 = vector.load %arg7[%17, %c0_14] : memref<16x128xf32, #tpu.memory_space<vmem>>, vector<1x128xf32>
    %c0_15 = arith.constant 0 : index
    %c1 = arith.constant 1 : index
    %19 = memref.load %arg1[%c0_15, %c1] : memref<2x8xi32, #tpu.memory_space<smem>>
    %20 = arith.index_cast %19 : i32 to index
    %c0_16 = arith.constant 0 : index
    %21 = vector.load %arg7[%20, %c0_16] : memref<16x128xf32, #tpu.memory_space<vmem>>, vector<1x128xf32>
    %c0_17 = arith.constant 0 : index
    %c2 = arith.constant 2 : index
    %22 = memref.load %arg1[%c0_17, %c2] : memref<2x8xi32, #tpu.memory_space<smem>>
    %23 = arith.index_cast %22 : i32 to index
    %c0_18 = arith.constant 0 : index
    %24 = vector.load %arg7[%23, %c0_18] : memref<16x128xf32, #tpu.memory_space<vmem>>, vector<1x128xf32>
    %c0_19 = arith.constant 0 : index
    %c3 = arith.constant 3 : index
    %25 = memref.load %arg1[%c0_19, %c3] : memref<2x8xi32, #tpu.memory_space<smem>>
    %26 = arith.index_cast %25 : i32 to index
    %c0_20 = arith.constant 0 : index
    %27 = vector.load %arg7[%26, %c0_20] : memref<16x128xf32, #tpu.memory_space<vmem>>, vector<1x128xf32>
    %c0_21 = arith.constant 0 : index
    %c4 = arith.constant 4 : index
    %28 = memref.load %arg1[%c0_21, %c4] : memref<2x8xi32, #tpu.memory_space<smem>>
    %29 = arith.index_cast %28 : i32 to index
    %c0_22 = arith.constant 0 : index
    %30 = vector.load %arg7[%29, %c0_22] : memref<16x128xf32, #tpu.memory_space<vmem>>, vector<1x128xf32>
    %c0_23 = arith.constant 0 : index
    %c5 = arith.constant 5 : index
    %31 = memref.load %arg1[%c0_23, %c5] : memref<2x8xi32, #tpu.memory_space<smem>>
    %32 = arith.index_cast %31 : i32 to index
    %c0_24 = arith.constant 0 : index
    %33 = vector.load %arg7[%32, %c0_24] : memref<16x128xf32, #tpu.memory_space<vmem>>, vector<1x128xf32>
    %c0_25 = arith.constant 0 : index
    %c6 = arith.constant 6 : index
    %34 = memref.load %arg1[%c0_25, %c6] : memref<2x8xi32, #tpu.memory_space<smem>>
    %35 = arith.index_cast %34 : i32 to index
    %c0_26 = arith.constant 0 : index
    %36 = vector.load %arg7[%35, %c0_26] : memref<16x128xf32, #tpu.memory_space<vmem>>, vector<1x128xf32>
    %c0_27 = arith.constant 0 : index
    %c7 = arith.constant 7 : index
    %37 = memref.load %arg1[%c0_27, %c7] : memref<2x8xi32, #tpu.memory_space<smem>>
    %38 = arith.index_cast %37 : i32 to index
    %c0_28 = arith.constant 0 : index
    %39 = vector.load %arg7[%38, %c0_28] : memref<16x128xf32, #tpu.memory_space<vmem>>, vector<1x128xf32>
    %c1_29 = arith.constant 1 : index
    %c0_30 = arith.constant 0 : index
    %40 = memref.load %arg1[%c1_29, %c0_30] : memref<2x8xi32, #tpu.memory_space<smem>>
    %41 = arith.index_cast %40 : i32 to index
    %c0_31 = arith.constant 0 : index
    %42 = vector.load %arg7[%41, %c0_31] : memref<16x128xf32, #tpu.memory_space<vmem>>, vector<1x128xf32>
    %c1_32 = arith.constant 1 : index
    %c1_33 = arith.constant 1 : index
    %43 = memref.load %arg1[%c1_32, %c1_33] : memref<2x8xi32, #tpu.memory_space<smem>>
    %44 = arith.index_cast %43 : i32 to index
    %c0_34 = arith.constant 0 : index
    %45 = vector.load %arg7[%44, %c0_34] : memref<16x128xf32, #tpu.memory_space<vmem>>, vector<1x128xf32>
    %c1_35 = arith.constant 1 : index
    %c2_36 = arith.constant 2 : index
    %46 = memref.load %arg1[%c1_35, %c2_36] : memref<2x8xi32, #tpu.memory_space<smem>>
    %47 = arith.index_cast %46 : i32 to index
    %c0_37 = arith.constant 0 : index
    %48 = vector.load %arg7[%47, %c0_37] : memref<16x128xf32, #tpu.memory_space<vmem>>, vector<1x128xf32>
    %c1_38 = arith.constant 1 : index
    %c3_39 = arith.constant 3 : index
    %49 = memref.load %arg1[%c1_38, %c3_39] : memref<2x8xi32, #tpu.memory_space<smem>>
    %50 = arith.index_cast %49 : i32 to index
    %c0_40 = arith.constant 0 : index
    %51 = vector.load %arg7[%50, %c0_40] : memref<16x128xf32, #tpu.memory_space<vmem>>, vector<1x128xf32>
    %c1_41 = arith.constant 1 : index
    %c4_42 = arith.constant 4 : index
    %52 = memref.load %arg1[%c1_41, %c4_42] : memref<2x8xi32, #tpu.memory_space<smem>>
    %53 = arith.index_cast %52 : i32 to index
    %c0_43 = arith.constant 0 : index
    %54 = vector.load %arg7[%53, %c0_43] : memref<16x128xf32, #tpu.memory_space<vmem>>, vector<1x128xf32>
    %c1_44 = arith.constant 1 : index
    %c5_45 = arith.constant 5 : index
    %55 = memref.load %arg1[%c1_44, %c5_45] : memref<2x8xi32, #tpu.memory_space<smem>>
    %56 = arith.index_cast %55 : i32 to index
    %c0_46 = arith.constant 0 : index
    %57 = vector.load %arg7[%56, %c0_46] : memref<16x128xf32, #tpu.memory_space<vmem>>, vector<1x128xf32>
    %c1_47 = arith.constant 1 : index
    %c6_48 = arith.constant 6 : index
    %58 = memref.load %arg1[%c1_47, %c6_48] : memref<2x8xi32, #tpu.memory_space<smem>>
    %59 = arith.index_cast %58 : i32 to index
    %c0_49 = arith.constant 0 : index
    %60 = vector.load %arg7[%59, %c0_49] : memref<16x128xf32, #tpu.memory_space<vmem>>, vector<1x128xf32>
    %c1_50 = arith.constant 1 : index
    %c7_51 = arith.constant 7 : index
    %61 = memref.load %arg1[%c1_50, %c7_51] : memref<2x8xi32, #tpu.memory_space<smem>>
    %62 = arith.index_cast %61 : i32 to index
    %c0_52 = arith.constant 0 : index
    %63 = vector.load %arg7[%62, %c0_52] : memref<16x128xf32, #tpu.memory_space<vmem>>, vector<1x128xf32>
    %64 = tpu.concatenate %18, %21, %24, %27, %30, %33, %36, %39, %42, %45, %48, %51, %54, %57, %60, %63 in 0 : vector<1x128xf32>, vector<1x128xf32>, vector<1x128xf32>, vector<1x128xf32>, vector<1x128xf32>, vector<1x128xf32>, vector<1x128xf32>, vector<1x128xf32>, vector<1x128xf32>, vector<1x128xf32>, vector<1x128xf32>, vector<1x128xf32>, vector<1x128xf32>, vector<1x128xf32>, vector<1x128xf32>, vector<1x128xf32> -> vector<16x128xf32>
    %65 = arith.addf %15, %64 : vector<16x128xf32>
    %66 = vector.shape_cast %65 : vector<16x128xf32> to vector<2x8x128xf32>
    %67 = tpu.transpose %66, [1, 0, 2] : vector<2x8x128xf32> -> vector<8x2x128xf32>
    %c0_53 = arith.constant 0 : index
    %c0_54 = arith.constant 0 : index
    %c0_55 = arith.constant 0 : index
    %68 = vector.load %arg17[%c0_53, %c0_54, %c0_55] : memref<8x2x128xf32, #tpu.memory_space<vmem>>, vector<8x2x128xf32>
    tpu.vector_store %arg17[%c0_53, %c0_54, %c0_55], %67 {strides = array<i32>} : memref<8x2x128xf32, #tpu.memory_space<vmem>>, vector<8x2x128xf32>,
    %69 = tpu.iota {dimensions = array<i32: 1>} : vector<1x128xi32>
    %c64_i32 = arith.constant 64 : i32
    %70 = vector.broadcast %c64_i32 : i32 to vector<1x128xi32>
    %71 = arith.cmpi sge, %69, %70 : vector<1x128xi32>
    %c96_i32 = arith.constant 96 : i32
    %72 = vector.broadcast %c96_i32 : i32 to vector<1x128xi32>
    %73 = arith.cmpi slt, %69, %72 : vector<1x128xi32>
    %74 = arith.andi %71, %73 : vector<1x128xi1>
    %cst_56 = arith.constant 1.000000e+00 : f32
    %cst_57 = arith.constant 5.000000e-01 : f32
    %75 = vector.broadcast %cst_56 : f32 to vector<1x128xf32>
    %76 = vector.broadcast %cst_57 : f32 to vector<1x128xf32>
    %77 = arith.select %74, %75, %76 : vector<1x128xi1>, vector<1x128xf32>
    %c0_58 = arith.constant 0 : index
    %c0_59 = arith.constant 0 : index
    %78 = vector.load %arg8[%c0_58, %c0_59] : memref<64x256xbf16, #tpu.memory_space<vmem>>, vector<64x256xbf16>
    %c0_60 = arith.constant 0 : index
    %c0_61 = arith.constant 0 : index
    %79 = vector.load %arg9[%c0_60, %c0_61] : memref<1x128xf32, #tpu.memory_space<vmem>>, vector<1x128xf32>
    %cst_62 = arith.constant 0.000000e+00 : f32
    %80 = vector.broadcast %cst_62 : f32 to vector<2x32xf32>
    %cst_63 = arith.constant 0.000000e+00 : f32
    %81 = vector.broadcast %cst_63 : f32 to vector<2x32xf32>
    %cst_64 = arith.constant 0.000000e+00 : f32
    %82 = vector.broadcast %cst_64 : f32 to vector<2x32xf32>
    %c0_65 = arith.constant 0 : index
    %c0_66 = arith.constant 0 : index
    %c0_67 = arith.constant 0 : index
    %83 = vector.load %arg17[%c0_65, %c0_66, %c0_67] : memref<8x2x128xf32, #tpu.memory_space<vmem>>, vector<1x2x128xf32>
    %84 = vector.shape_cast %83 : vector<1x2x128xf32> to vector<2x128xf32>
    %85 = vector.broadcast %77 : vector<1x128xf32> to vector<2x128xf32>
    %86 = arith.mulf %84, %85 : vector<2x128xf32>
    %87 = math.tanh %86 : vector<2x128xf32>
    %88 = vector.extract_strided_slice %87 {offsets = [0, 0], sizes = [2, 32], strides = [1, 1]} : vector<2x128xf32> to vector<2x32xf32>
    %cst_68 = arith.constant 5.000000e-01 : f32
    %89 = vector.broadcast %cst_68 : f32 to vector<2x32xf32>
    %90 = arith.mulf %88, %89 : vector<2x32xf32>
    %cst_69 = arith.constant 5.000000e-01 : f32
    %91 = vector.broadcast %cst_69 : f32 to vector<2x32xf32>
    %92 = arith.addf %90, %91 : vector<2x32xf32>
    %93 = vector.extract_strided_slice %87 {offsets = [0, 32], sizes = [2, 32], strides = [1, 1]} : vector<2x128xf32> to vector<2x32xf32>
    %cst_70 = arith.constant 5.000000e-01 : f32
    %94 = vector.broadcast %cst_70 : f32 to vector<2x32xf32>
    %95 = arith.mulf %93, %94 : vector<2x32xf32>
    %cst_71 = arith.constant 5.000000e-01 : f32
    %96 = vector.broadcast %cst_71 : f32 to vector<2x32xf32>
    %97 = arith.addf %95, %96 : vector<2x32xf32>
    %98 = vector.extract_strided_slice %87 {offsets = [0, 64], sizes = [2, 32], strides = [1, 1]} : vector<2x128xf32> to vector<2x32xf32>
    %99 = vector.extract_strided_slice %87 {offsets = [0, 96], sizes = [2, 32], strides = [1, 1]} : vector<2x128xf32> to vector<2x32xf32>
    %cst_72 = arith.constant 5.000000e-01 : f32
    %100 = vector.broadcast %cst_72 : f32 to vector<2x32xf32>
    %101 = arith.mulf %99, %100 : vector<2x32xf32>
    %cst_73 = arith.constant 5.000000e-01 : f32
    %102 = vector.broadcast %cst_73 : f32 to vector<2x32xf32>
    %103 = arith.addf %101, %102 : vector<2x32xf32>
    %104 = arith.mulf %97, %80 : vector<2x32xf32>
    %105 = arith.mulf %92, %98 : vector<2x32xf32>
    %106 = arith.addf %104, %105 : vector<2x32xf32>
    %107 = math.tanh %106 : vector<2x32xf32>
    %108 = arith.mulf %103, %107 : vector<2x32xf32>
    %109 = tpu.concatenate %108, %81 in 1 : vector<2x32xf32>, vector<2x32xf32> -> vector<2x64xf32>
    %110 = arith.truncf %109 : vector<2x64xf32> to vector<2x64xbf16>
    %cst_74 = arith.constant dense<0.000000e+00> : vector<2x256xf32>
    %111 = tpu.matmul %110, %78, %cst_74 {dimension_numbers = #tpu.dot_dimension_numbers<[1], [0], [0], [1], [0, 0, 1, 1], [], []>} : vector<2x64xbf16>, vector<64x256xbf16>, vector<2x256xf32> -> vector<2x256xf32>
    %112 = vector.extract_strided_slice %111 {offsets = [0, 0], sizes = [2, 128], strides = [1, 1]} : vector<2x256xf32> to vector<2x128xf32>
    %c1_75 = arith.constant 1 : index
    %c0_76 = arith.constant 0 : index
    %c0_77 = arith.constant 0 : index
    %113 = vector.load %arg17[%c1_75, %c0_76, %c0_77] : memref<8x2x128xf32, #tpu.memory_space<vmem>>, vector<1x2x128xf32>
    %114 = vector.shape_cast %113 : vector<1x2x128xf32> to vector<2x128xf32>
    %115 = arith.addf %112, %114 : vector<2x128xf32>
    %116 = vector.broadcast %77 : vector<1x128xf32> to vector<2x128xf32>
    %117 = arith.mulf %115, %116 : vector<2x128xf32>
    %118 = math.tanh %117 : vector<2x128xf32>
    %119 = vector.extract_strided_slice %118 {offsets = [0, 0], sizes = [2, 32], strides = [1, 1]} : vector<2x128xf32> to vector<2x32xf32>
    %cst_78 = arith.constant 5.000000e-01 : f32
    %120 = vector.broadcast %cst_78 : f32 to vector<2x32xf32>
    %121 = arith.mulf %119, %120 : vector<2x32xf32>
    %cst_79 = arith.constant 5.000000e-01 : f32
    %122 = vector.broadcast %cst_79 : f32 to vector<2x32xf32>
    %123 = arith.addf %121, %122 : vector<2x32xf32>
    %124 = vector.extract_strided_slice %118 {offsets = [0, 32], sizes = [2, 32], strides = [1, 1]} : vector<2x128xf32> to vector<2x32xf32>
    %cst_80 = arith.constant 5.000000e-01 : f32
    %125 = vector.broadcast %cst_80 : f32 to vector<2x32xf32>
    %126 = arith.mulf %124, %125 : vector<2x32xf32>
    %cst_81 = arith.constant 5.000000e-01 : f32
    %127 = vector.broadcast %cst_81 : f32 to vector<2x32xf32>
    %128 = arith.addf %126, %127 : vector<2x32xf32>
    %129 = vector.extract_strided_slice %118 {offsets = [0, 64], sizes = [2, 32], strides = [1, 1]} : vector<2x128xf32> to vector<2x32xf32>
    %130 = vector.extract_strided_slice %118 {offsets = [0, 96], sizes = [2, 32], strides = [1, 1]} : vector<2x128xf32> to vector<2x32xf32>
    %cst_82 = arith.constant 5.000000e-01 : f32
    %131 = vector.broadcast %cst_82 : f32 to vector<2x32xf32>
    %132 = arith.mulf %130, %131 : vector<2x32xf32>
    %cst_83 = arith.constant 5.000000e-01 : f32
    %133 = vector.broadcast %cst_83 : f32 to vector<2x32xf32>
    %134 = arith.addf %132, %133 : vector<2x32xf32>
    %135 = arith.mulf %128, %106 : vector<2x32xf32>
    %136 = arith.mulf %123, %129 : vector<2x32xf32>
    %137 = arith.addf %135, %136 : vector<2x32xf32>
    %138 = math.tanh %137 : vector<2x32xf32>
    %139 = arith.mulf %134, %138 : vector<2x32xf32>
    %140 = vector.extract_strided_slice %111 {offsets = [0, 128], sizes = [2, 128], strides = [1, 1]} : vector<2x256xf32> to vector<2x128xf32>
    %141 = vector.broadcast %79 : vector<1x128xf32> to vector<2x128xf32>
    %142 = arith.addf %140, %141 : vector<2x128xf32>
    %143 = vector.broadcast %77 : vector<1x128xf32> to vector<2x128xf32>
    %144 = arith.mulf %142, %143 : vector<2x128xf32>
    %145 = math.tanh %144 : vector<2x128xf32>
    %146 = vector.extract_strided_slice %145 {offsets = [0, 0], sizes = [2, 32], strides = [1, 1]} : vector<2x128xf32> to vector<2x32xf32>
    %cst_84 = arith.constant 5.000000e-01 : f32
    %147 = vector.broadcast %cst_84 : f32 to vector<2x32xf32>
    %148 = arith.mulf %146, %147 : vector<2x32xf32>
    %cst_85 = arith.constant 5.000000e-01 : f32
    %149 = vector.broadcast %cst_85 : f32 to vector<2x32xf32>
    %150 = arith.addf %148, %149 : vector<2x32xf32>
    %151 = vector.extract_strided_slice %145 {offsets = [0, 32], sizes = [2, 32], strides = [1, 1]} : vector<2x128xf32> to vector<2x32xf32>
    %cst_86 = arith.constant 5.000000e-01 : f32
    %152 = vector.broadcast %cst_86 : f32 to vector<2x32xf32>
    %153 = arith.mulf %151, %152 : vector<2x32xf32>
    %cst_87 = arith.constant 5.000000e-01 : f32
    %154 = vector.broadcast %cst_87 : f32 to vector<2x32xf32>
    %155 = arith.addf %153, %154 : vector<2x32xf32>
    %156 = vector.extract_strided_slice %145 {offsets = [0, 64], sizes = [2, 32], strides = [1, 1]} : vector<2x128xf32> to vector<2x32xf32>
    %157 = vector.extract_strided_slice %145 {offsets = [0, 96], sizes = [2, 32], strides = [1, 1]} : vector<2x128xf32> to vector<2x32xf32>
    %cst_88 = arith.constant 5.000000e-01 : f32
    %158 = vector.broadcast %cst_88 : f32 to vector<2x32xf32>
    %159 = arith.mulf %157, %158 : vector<2x32xf32>
    %cst_89 = arith.constant 5.000000e-01 : f32
    %160 = vector.broadcast %cst_89 : f32 to vector<2x32xf32>
    %161 = arith.addf %159, %160 : vector<2x32xf32>
    %162 = arith.mulf %155, %82 : vector<2x32xf32>
    %163 = arith.mulf %150, %156 : vector<2x32xf32>
    %164 = arith.addf %162, %163 : vector<2x32xf32>
    %165 = math.tanh %164 : vector<2x32xf32>
    %166 = arith.mulf %161, %165 : vector<2x32xf32>
    %167 = tpu.concatenate %139, %166 in 1 : vector<2x32xf32>, vector<2x32xf32> -> vector<2x64xf32>
    %168 = arith.truncf %167 : vector<2x64xf32> to vector<2x64xbf16>
    %cst_90 = arith.constant dense<0.000000e+00> : vector<2x256xf32>
    %169 = tpu.matmul %168, %78, %cst_90 {dimension_numbers = #tpu.dot_dimension_numbers<[1], [0], [0], [1], [0, 0, 1, 1], [], []>} : vector<2x64xbf16>, vector<64x256xbf16>, vector<2x256xf32> -> vector<2x256xf32>
    %170 = vector.extract_strided_slice %169 {offsets = [0, 0], sizes = [2, 128], strides = [1, 1]} : vector<2x256xf32> to vector<2x128xf32>
    %c2_91 = arith.constant 2 : index
    %c0_92 = arith.constant 0 : index
    %c0_93 = arith.constant 0 : index
    %171 = vector.load %arg17[%c2_91, %c0_92, %c0_93] : memref<8x2x128xf32, #tpu.memory_space<vmem>>, vector<1x2x128xf32>
    %172 = vector.shape_cast %171 : vector<1x2x128xf32> to vector<2x128xf32>
    %173 = arith.addf %170, %172 : vector<2x128xf32>
    %174 = vector.broadcast %77 : vector<1x128xf32> to vector<2x128xf32>
    %175 = arith.mulf %173, %174 : vector<2x128xf32>
    %176 = math.tanh %175 : vector<2x128xf32>
    %177 = vector.extract_strided_slice %176 {offsets = [0, 0], sizes = [2, 32], strides = [1, 1]} : vector<2x128xf32> to vector<2x32xf32>
    %cst_94 = arith.constant 5.000000e-01 : f32
    %178 = vector.broadcast %cst_94 : f32 to vector<2x32xf32>
    %179 = arith.mulf %177, %178 : vector<2x32xf32>
    %cst_95 = arith.constant 5.000000e-01 : f32
    %180 = vector.broadcast %cst_95 : f32 to vector<2x32xf32>
    %181 = arith.addf %179, %180 : vector<2x32xf32>
    %182 = vector.extract_strided_slice %176 {offsets = [0, 32], sizes = [2, 32], strides = [1, 1]} : vector<2x128xf32> to vector<2x32xf32>
    %cst_96 = arith.constant 5.000000e-01 : f32
    %183 = vector.broadcast %cst_96 : f32 to vector<2x32xf32>
    %184 = arith.mulf %182, %183 : vector<2x32xf32>
    %cst_97 = arith.constant 5.000000e-01 : f32
    %185 = vector.broadcast %cst_97 : f32 to vector<2x32xf32>
    %186 = arith.addf %184, %185 : vector<2x32xf32>
    %187 = vector.extract_strided_slice %176 {offsets = [0, 64], sizes = [2, 32], strides = [1, 1]} : vector<2x128xf32> to vector<2x32xf32>
    %188 = vector.extract_strided_slice %176 {offsets = [0, 96], sizes = [2, 32], strides = [1, 1]} : vector<2x128xf32> to vector<2x32xf32>
    %cst_98 = arith.constant 5.000000e-01 : f32
    %189 = vector.broadcast %cst_98 : f32 to vector<2x32xf32>
    %190 = arith.mulf %188, %189 : vector<2x32xf32>
    %cst_99 = arith.constant 5.000000e-01 : f32
    %191 = vector.broadcast %cst_99 : f32 to vector<2x32xf32>
    %192 = arith.addf %190, %191 : vector<2x32xf32>
    %193 = arith.mulf %186, %137 : vector<2x32xf32>
    %194 = arith.mulf %181, %187 : vector<2x32xf32>
    %195 = arith.addf %193, %194 : vector<2x32xf32>
    %196 = math.tanh %195 : vector<2x32xf32>
    %197 = arith.mulf %192, %196 : vector<2x32xf32>
    %198 = vector.extract_strided_slice %169 {offsets = [0, 128], sizes = [2, 128], strides = [1, 1]} : vector<2x256xf32> to vector<2x128xf32>
    %199 = vector.broadcast %79 : vector<1x128xf32> to vector<2x128xf32>
    %200 = arith.addf %198, %199 : vector<2x128xf32>
    %201 = vector.broadcast %77 : vector<1x128xf32> to vector<2x128xf32>
    %202 = arith.mulf %200, %201 : vector<2x128xf32>
    %203 = math.tanh %202 : vector<2x128xf32>
    %204 = vector.extract_strided_slice %203 {offsets = [0, 0], sizes = [2, 32], strides = [1, 1]} : vector<2x128xf32> to vector<2x32xf32>
    %cst_100 = arith.constant 5.000000e-01 : f32
    %205 = vector.broadcast %cst_100 : f32 to vector<2x32xf32>
    %206 = arith.mulf %204, %205 : vector<2x32xf32>
    %cst_101 = arith.constant 5.000000e-01 : f32
    %207 = vector.broadcast %cst_101 : f32 to vector<2x32xf32>
    %208 = arith.addf %206, %207 : vector<2x32xf32>
    %209 = vector.extract_strided_slice %203 {offsets = [0, 32], sizes = [2, 32], strides = [1, 1]} : vector<2x128xf32> to vector<2x32xf32>
    %cst_102 = arith.constant 5.000000e-01 : f32
    %210 = vector.broadcast %cst_102 : f32 to vector<2x32xf32>
    %211 = arith.mulf %209, %210 : vector<2x32xf32>
    %cst_103 = arith.constant 5.000000e-01 : f32
    %212 = vector.broadcast %cst_103 : f32 to vector<2x32xf32>
    %213 = arith.addf %211, %212 : vector<2x32xf32>
    %214 = vector.extract_strided_slice %203 {offsets = [0, 64], sizes = [2, 32], strides = [1, 1]} : vector<2x128xf32> to vector<2x32xf32>
    %215 = vector.extract_strided_slice %203 {offsets = [0, 96], sizes = [2, 32], strides = [1, 1]} : vector<2x128xf32> to vector<2x32xf32>
    %cst_104 = arith.constant 5.000000e-01 : f32
    %216 = vector.broadcast %cst_104 : f32 to vector<2x32xf32>
    %217 = arith.mulf %215, %216 : vector<2x32xf32>
    %cst_105 = arith.constant 5.000000e-01 : f32
    %218 = vector.broadcast %cst_105 : f32 to vector<2x32xf32>
    %219 = arith.addf %217, %218 : vector<2x32xf32>
    %220 = arith.mulf %213, %164 : vector<2x32xf32>
    %221 = arith.mulf %208, %214 : vector<2x32xf32>
    %222 = arith.addf %220, %221 : vector<2x32xf32>
    %223 = math.tanh %222 : vector<2x32xf32>
    %224 = arith.mulf %219, %223 : vector<2x32xf32>
    %225 = tpu.concatenate %197, %224 in 1 : vector<2x32xf32>, vector<2x32xf32> -> vector<2x64xf32>
    %226 = arith.truncf %225 : vector<2x64xf32> to vector<2x64xbf16>
    %cst_106 = arith.constant dense<0.000000e+00> : vector<2x256xf32>
    %227 = tpu.matmul %226, %78, %cst_106 {dimension_numbers = #tpu.dot_dimension_numbers<[1], [0], [0], [1], [0, 0, 1, 1], [], []>} : vector<2x64xbf16>, vector<64x256xbf16>, vector<2x256xf32> -> vector<2x256xf32>
    %228 = vector.extract_strided_slice %227 {offsets = [0, 0], sizes = [2, 128], strides = [1, 1]} : vector<2x256xf32> to vector<2x128xf32>
    %c3_107 = arith.constant 3 : index
    %c0_108 = arith.constant 0 : index
    %c0_109 = arith.constant 0 : index
    %229 = vector.load %arg17[%c3_107, %c0_108, %c0_109] : memref<8x2x128xf32, #tpu.memory_space<vmem>>, vector<1x2x128xf32>
    %230 = vector.shape_cast %229 : vector<1x2x128xf32> to vector<2x128xf32>
    %231 = arith.addf %228, %230 : vector<2x128xf32>
    %232 = vector.broadcast %77 : vector<1x128xf32> to vector<2x128xf32>
    %233 = arith.mulf %231, %232 : vector<2x128xf32>
    %234 = math.tanh %233 : vector<2x128xf32>
    %235 = vector.extract_strided_slice %234 {offsets = [0, 0], sizes = [2, 32], strides = [1, 1]} : vector<2x128xf32> to vector<2x32xf32>
    %cst_110 = arith.constant 5.000000e-01 : f32
    %236 = vector.broadcast %cst_110 : f32 to vector<2x32xf32>
    %237 = arith.mulf %235, %236 : vector<2x32xf32>
    %cst_111 = arith.constant 5.000000e-01 : f32
    %238 = vector.broadcast %cst_111 : f32 to vector<2x32xf32>
    %239 = arith.addf %237, %238 : vector<2x32xf32>
    %240 = vector.extract_strided_slice %234 {offsets = [0, 32], sizes = [2, 32], strides = [1, 1]} : vector<2x128xf32> to vector<2x32xf32>
    %cst_112 = arith.constant 5.000000e-01 : f32
    %241 = vector.broadcast %cst_112 : f32 to vector<2x32xf32>
    %242 = arith.mulf %240, %241 : vector<2x32xf32>
    %cst_113 = arith.constant 5.000000e-01 : f32
    %243 = vector.broadcast %cst_113 : f32 to vector<2x32xf32>
    %244 = arith.addf %242, %243 : vector<2x32xf32>
    %245 = vector.extract_strided_slice %234 {offsets = [0, 64], sizes = [2, 32], strides = [1, 1]} : vector<2x128xf32> to vector<2x32xf32>
    %246 = vector.extract_strided_slice %234 {offsets = [0, 96], sizes = [2, 32], strides = [1, 1]} : vector<2x128xf32> to vector<2x32xf32>
    %cst_114 = arith.constant 5.000000e-01 : f32
    %247 = vector.broadcast %cst_114 : f32 to vector<2x32xf32>
    %248 = arith.mulf %246, %247 : vector<2x32xf32>
    %cst_115 = arith.constant 5.000000e-01 : f32
    %249 = vector.broadcast %cst_115 : f32 to vector<2x32xf32>
    %250 = arith.addf %248, %249 : vector<2x32xf32>
    %251 = arith.mulf %244, %195 : vector<2x32xf32>
    %252 = arith.mulf %239, %245 : vector<2x32xf32>
    %253 = arith.addf %251, %252 : vector<2x32xf32>
    %254 = math.tanh %253 : vector<2x32xf32>
    %255 = arith.mulf %250, %254 : vector<2x32xf32>
    %256 = vector.extract_strided_slice %227 {offsets = [0, 128], sizes = [2, 128], strides = [1, 1]} : vector<2x256xf32> to vector<2x128xf32>
    %257 = vector.broadcast %79 : vector<1x128xf32> to vector<2x128xf32>
    %258 = arith.addf %256, %257 : vector<2x128xf32>
    %259 = vector.broadcast %77 : vector<1x128xf32> to vector<2x128xf32>
    %260 = arith.mulf %258, %259 : vector<2x128xf32>
    %261 = math.tanh %260 : vector<2x128xf32>
    %262 = vector.extract_strided_slice %261 {offsets = [0, 0], sizes = [2, 32], strides = [1, 1]} : vector<2x128xf32> to vector<2x32xf32>
    %cst_116 = arith.constant 5.000000e-01 : f32
    %263 = vector.broadcast %cst_116 : f32 to vector<2x32xf32>
    %264 = arith.mulf %262, %263 : vector<2x32xf32>
    %cst_117 = arith.constant 5.000000e-01 : f32
    %265 = vector.broadcast %cst_117 : f32 to vector<2x32xf32>
    %266 = arith.addf %264, %265 : vector<2x32xf32>
    %267 = vector.extract_strided_slice %261 {offsets = [0, 32], sizes = [2, 32], strides = [1, 1]} : vector<2x128xf32> to vector<2x32xf32>
    %cst_118 = arith.constant 5.000000e-01 : f32
    %268 = vector.broadcast %cst_118 : f32 to vector<2x32xf32>
    %269 = arith.mulf %267, %268 : vector<2x32xf32>
    %cst_119 = arith.constant 5.000000e-01 : f32
    %270 = vector.broadcast %cst_119 : f32 to vector<2x32xf32>
    %271 = arith.addf %269, %270 : vector<2x32xf32>
    %272 = vector.extract_strided_slice %261 {offsets = [0, 64], sizes = [2, 32], strides = [1, 1]} : vector<2x128xf32> to vector<2x32xf32>
    %273 = vector.extract_strided_slice %261 {offsets = [0, 96], sizes = [2, 32], strides = [1, 1]} : vector<2x128xf32> to vector<2x32xf32>
    %cst_120 = arith.constant 5.000000e-01 : f32
    %274 = vector.broadcast %cst_120 : f32 to vector<2x32xf32>
    %275 = arith.mulf %273, %274 : vector<2x32xf32>
    %cst_121 = arith.constant 5.000000e-01 : f32
    %276 = vector.broadcast %cst_121 : f32 to vector<2x32xf32>
    %277 = arith.addf %275, %276 : vector<2x32xf32>
    %278 = arith.mulf %271, %222 : vector<2x32xf32>
    %279 = arith.mulf %266, %272 : vector<2x32xf32>
    %280 = arith.addf %278, %279 : vector<2x32xf32>
    %281 = math.tanh %280 : vector<2x32xf32>
    %282 = arith.mulf %277, %281 : vector<2x32xf32>
    %283 = tpu.concatenate %255, %282 in 1 : vector<2x32xf32>, vector<2x32xf32> -> vector<2x64xf32>
    %284 = arith.truncf %283 : vector<2x64xf32> to vector<2x64xbf16>
    %cst_122 = arith.constant dense<0.000000e+00> : vector<2x256xf32>
    %285 = tpu.matmul %284, %78, %cst_122 {dimension_numbers = #tpu.dot_dimension_numbers<[1], [0], [0], [1], [0, 0, 1, 1], [], []>} : vector<2x64xbf16>, vector<64x256xbf16>, vector<2x256xf32> -> vector<2x256xf32>
    %286 = vector.extract_strided_slice %285 {offsets = [0, 0], sizes = [2, 128], strides = [1, 1]} : vector<2x256xf32> to vector<2x128xf32>
    %c4_123 = arith.constant 4 : index
    %c0_124 = arith.constant 0 : index
    %c0_125 = arith.constant 0 : index
    %287 = vector.load %arg17[%c4_123, %c0_124, %c0_125] : memref<8x2x128xf32, #tpu.memory_space<vmem>>, vector<1x2x128xf32>
    %288 = vector.shape_cast %287 : vector<1x2x128xf32> to vector<2x128xf32>
    %289 = arith.addf %286, %288 : vector<2x128xf32>
    %290 = vector.broadcast %77 : vector<1x128xf32> to vector<2x128xf32>
    %291 = arith.mulf %289, %290 : vector<2x128xf32>
    %292 = math.tanh %291 : vector<2x128xf32>
    %293 = vector.extract_strided_slice %292 {offsets = [0, 0], sizes = [2, 32], strides = [1, 1]} : vector<2x128xf32> to vector<2x32xf32>
    %cst_126 = arith.constant 5.000000e-01 : f32
    %294 = vector.broadcast %cst_126 : f32 to vector<2x32xf32>
    %295 = arith.mulf %293, %294 : vector<2x32xf32>
    %cst_127 = arith.constant 5.000000e-01 : f32
    %296 = vector.broadcast %cst_127 : f32 to vector<2x32xf32>
    %297 = arith.addf %295, %296 : vector<2x32xf32>
    %298 = vector.extract_strided_slice %292 {offsets = [0, 32], sizes = [2, 32], strides = [1, 1]} : vector<2x128xf32> to vector<2x32xf32>
    %cst_128 = arith.constant 5.000000e-01 : f32
    %299 = vector.broadcast %cst_128 : f32 to vector<2x32xf32>
    %300 = arith.mulf %298, %299 : vector<2x32xf32>
    %cst_129 = arith.constant 5.000000e-01 : f32
    %301 = vector.broadcast %cst_129 : f32 to vector<2x32xf32>
    %302 = arith.addf %300, %301 : vector<2x32xf32>
    %303 = vector.extract_strided_slice %292 {offsets = [0, 64], sizes = [2, 32], strides = [1, 1]} : vector<2x128xf32> to vector<2x32xf32>
    %304 = vector.extract_strided_slice %292 {offsets = [0, 96], sizes = [2, 32], strides = [1, 1]} : vector<2x128xf32> to vector<2x32xf32>
    %cst_130 = arith.constant 5.000000e-01 : f32
    %305 = vector.broadcast %cst_130 : f32 to vector<2x32xf32>
    %306 = arith.mulf %304, %305 : vector<2x32xf32>
    %cst_131 = arith.constant 5.000000e-01 : f32
    %307 = vector.broadcast %cst_131 : f32 to vector<2x32xf32>
    %308 = arith.addf %306, %307 : vector<2x32xf32>
    %309 = arith.mulf %302, %253 : vector<2x32xf32>
    %310 = arith.mulf %297, %303 : vector<2x32xf32>
    %311 = arith.addf %309, %310 : vector<2x32xf32>
    %312 = math.tanh %311 : vector<2x32xf32>
    %313 = arith.mulf %308, %312 : vector<2x32xf32>
    %314 = vector.extract_strided_slice %285 {offsets = [0, 128], sizes = [2, 128], strides = [1, 1]} : vector<2x256xf32> to vector<2x128xf32>
    %315 = vector.broadcast %79 : vector<1x128xf32> to vector<2x128xf32>
    %316 = arith.addf %314, %315 : vector<2x128xf32>
    %317 = vector.broadcast %77 : vector<1x128xf32> to vector<2x128xf32>
    %318 = arith.mulf %316, %317 : vector<2x128xf32>
    %319 = math.tanh %318 : vector<2x128xf32>
    %320 = vector.extract_strided_slice %319 {offsets = [0, 0], sizes = [2, 32], strides = [1, 1]} : vector<2x128xf32> to vector<2x32xf32>
    %cst_132 = arith.constant 5.000000e-01 : f32
    %321 = vector.broadcast %cst_132 : f32 to vector<2x32xf32>
    %322 = arith.mulf %320, %321 : vector<2x32xf32>
    %cst_133 = arith.constant 5.000000e-01 : f32
    %323 = vector.broadcast %cst_133 : f32 to vector<2x32xf32>
    %324 = arith.addf %322, %323 : vector<2x32xf32>
    %325 = vector.extract_strided_slice %319 {offsets = [0, 32], sizes = [2, 32], strides = [1, 1]} : vector<2x128xf32> to vector<2x32xf32>
    %cst_134 = arith.constant 5.000000e-01 : f32
    %326 = vector.broadcast %cst_134 : f32 to vector<2x32xf32>
    %327 = arith.mulf %325, %326 : vector<2x32xf32>
    %cst_135 = arith.constant 5.000000e-01 : f32
    %328 = vector.broadcast %cst_135 : f32 to vector<2x32xf32>
    %329 = arith.addf %327, %328 : vector<2x32xf32>
    %330 = vector.extract_strided_slice %319 {offsets = [0, 64], sizes = [2, 32], strides = [1, 1]} : vector<2x128xf32> to vector<2x32xf32>
    %331 = vector.extract_strided_slice %319 {offsets = [0, 96], sizes = [2, 32], strides = [1, 1]} : vector<2x128xf32> to vector<2x32xf32>
    %cst_136 = arith.constant 5.000000e-01 : f32
    %332 = vector.broadcast %cst_136 : f32 to vector<2x32xf32>
    %333 = arith.mulf %331, %332 : vector<2x32xf32>
    %cst_137 = arith.constant 5.000000e-01 : f32
    %334 = vector.broadcast %cst_137 : f32 to vector<2x32xf32>
    %335 = arith.addf %333, %334 : vector<2x32xf32>
    %336 = arith.mulf %329, %280 : vector<2x32xf32>
    %337 = arith.mulf %324, %330 : vector<2x32xf32>
    %338 = arith.addf %336, %337 : vector<2x32xf32>
    %339 = math.tanh %338 : vector<2x32xf32>
    %340 = arith.mulf %335, %339 : vector<2x32xf32>
    %341 = tpu.concatenate %313, %340 in 1 : vector<2x32xf32>, vector<2x32xf32> -> vector<2x64xf32>
    %342 = arith.truncf %341 : vector<2x64xf32> to vector<2x64xbf16>
    %cst_138 = arith.constant dense<0.000000e+00> : vector<2x256xf32>
    %343 = tpu.matmul %342, %78, %cst_138 {dimension_numbers = #tpu.dot_dimension_numbers<[1], [0], [0], [1], [0, 0, 1, 1], [], []>} : vector<2x64xbf16>, vector<64x256xbf16>, vector<2x256xf32> -> vector<2x256xf32>
    %344 = vector.extract_strided_slice %343 {offsets = [0, 0], sizes = [2, 128], strides = [1, 1]} : vector<2x256xf32> to vector<2x128xf32>
    %c5_139 = arith.constant 5 : index
    %c0_140 = arith.constant 0 : index
    %c0_141 = arith.constant 0 : index
    %345 = vector.load %arg17[%c5_139, %c0_140, %c0_141] : memref<8x2x128xf32, #tpu.memory_space<vmem>>, vector<1x2x128xf32>
    %346 = vector.shape_cast %345 : vector<1x2x128xf32> to vector<2x128xf32>
    %347 = arith.addf %344, %346 : vector<2x128xf32>
    %348 = vector.broadcast %77 : vector<1x128xf32> to vector<2x128xf32>
    %349 = arith.mulf %347, %348 : vector<2x128xf32>
    %350 = math.tanh %349 : vector<2x128xf32>
    %351 = vector.extract_strided_slice %350 {offsets = [0, 0], sizes = [2, 32], strides = [1, 1]} : vector<2x128xf32> to vector<2x32xf32>
    %cst_142 = arith.constant 5.000000e-01 : f32
    %352 = vector.broadcast %cst_142 : f32 to vector<2x32xf32>
    %353 = arith.mulf %351, %352 : vector<2x32xf32>
    %cst_143 = arith.constant 5.000000e-01 : f32
    %354 = vector.broadcast %cst_143 : f32 to vector<2x32xf32>
    %355 = arith.addf %353, %354 : vector<2x32xf32>
    %356 = vector.extract_strided_slice %350 {offsets = [0, 32], sizes = [2, 32], strides = [1, 1]} : vector<2x128xf32> to vector<2x32xf32>
    %cst_144 = arith.constant 5.000000e-01 : f32
    %357 = vector.broadcast %cst_144 : f32 to vector<2x32xf32>
    %358 = arith.mulf %356, %357 : vector<2x32xf32>
    %cst_145 = arith.constant 5.000000e-01 : f32
    %359 = vector.broadcast %cst_145 : f32 to vector<2x32xf32>
    %360 = arith.addf %358, %359 : vector<2x32xf32>
    %361 = vector.extract_strided_slice %350 {offsets = [0, 64], sizes = [2, 32], strides = [1, 1]} : vector<2x128xf32> to vector<2x32xf32>
    %362 = vector.extract_strided_slice %350 {offsets = [0, 96], sizes = [2, 32], strides = [1, 1]} : vector<2x128xf32> to vector<2x32xf32>
    %cst_146 = arith.constant 5.000000e-01 : f32
    %363 = vector.broadcast %cst_146 : f32 to vector<2x32xf32>
    %364 = arith.mulf %362, %363 : vector<2x32xf32>
    %cst_147 = arith.constant 5.000000e-01 : f32
    %365 = vector.broadcast %cst_147 : f32 to vector<2x32xf32>
    %366 = arith.addf %364, %365 : vector<2x32xf32>
    %367 = arith.mulf %360, %311 : vector<2x32xf32>
    %368 = arith.mulf %355, %361 : vector<2x32xf32>
    %369 = arith.addf %367, %368 : vector<2x32xf32>
    %370 = math.tanh %369 : vector<2x32xf32>
    %371 = arith.mulf %366, %370 : vector<2x32xf32>
    %372 = vector.extract_strided_slice %343 {offsets = [0, 128], sizes = [2, 128], strides = [1, 1]} : vector<2x256xf32> to vector<2x128xf32>
    %373 = vector.broadcast %79 : vector<1x128xf32> to vector<2x128xf32>
    %374 = arith.addf %372, %373 : vector<2x128xf32>
    %375 = vector.broadcast %77 : vector<1x128xf32> to vector<2x128xf32>
    %376 = arith.mulf %374, %375 : vector<2x128xf32>
    %377 = math.tanh %376 : vector<2x128xf32>
    %378 = vector.extract_strided_slice %377 {offsets = [0, 0], sizes = [2, 32], strides = [1, 1]} : vector<2x128xf32> to vector<2x32xf32>
    %cst_148 = arith.constant 5.000000e-01 : f32
    %379 = vector.broadcast %cst_148 : f32 to vector<2x32xf32>
    %380 = arith.mulf %378, %379 : vector<2x32xf32>
    %cst_149 = arith.constant 5.000000e-01 : f32
    %381 = vector.broadcast %cst_149 : f32 to vector<2x32xf32>
    %382 = arith.addf %380, %381 : vector<2x32xf32>
    %383 = vector.extract_strided_slice %377 {offsets = [0, 32], sizes = [2, 32], strides = [1, 1]} : vector<2x128xf32> to vector<2x32xf32>
    %cst_150 = arith.constant 5.000000e-01 : f32
    %384 = vector.broadcast %cst_150 : f32 to vector<2x32xf32>
    %385 = arith.mulf %383, %384 : vector<2x32xf32>
    %cst_151 = arith.constant 5.000000e-01 : f32
    %386 = vector.broadcast %cst_151 : f32 to vector<2x32xf32>
    %387 = arith.addf %385, %386 : vector<2x32xf32>
    %388 = vector.extract_strided_slice %377 {offsets = [0, 64], sizes = [2, 32], strides = [1, 1]} : vector<2x128xf32> to vector<2x32xf32>
    %389 = vector.extract_strided_slice %377 {offsets = [0, 96], sizes = [2, 32], strides = [1, 1]} : vector<2x128xf32> to vector<2x32xf32>
    %cst_152 = arith.constant 5.000000e-01 : f32
    %390 = vector.broadcast %cst_152 : f32 to vector<2x32xf32>
    %391 = arith.mulf %389, %390 : vector<2x32xf32>
    %cst_153 = arith.constant 5.000000e-01 : f32
    %392 = vector.broadcast %cst_153 : f32 to vector<2x32xf32>
    %393 = arith.addf %391, %392 : vector<2x32xf32>
    %394 = arith.mulf %387, %338 : vector<2x32xf32>
    %395 = arith.mulf %382, %388 : vector<2x32xf32>
    %396 = arith.addf %394, %395 : vector<2x32xf32>
    %397 = math.tanh %396 : vector<2x32xf32>
    %398 = arith.mulf %393, %397 : vector<2x32xf32>
    %399 = tpu.concatenate %371, %398 in 1 : vector<2x32xf32>, vector<2x32xf32> -> vector<2x64xf32>
    %400 = arith.truncf %399 : vector<2x64xf32> to vector<2x64xbf16>
    %cst_154 = arith.constant dense<0.000000e+00> : vector<2x256xf32>
    %401 = tpu.matmul %400, %78, %cst_154 {dimension_numbers = #tpu.dot_dimension_numbers<[1], [0], [0], [1], [0, 0, 1, 1], [], []>} : vector<2x64xbf16>, vector<64x256xbf16>, vector<2x256xf32> -> vector<2x256xf32>
    %402 = vector.extract_strided_slice %401 {offsets = [0, 0], sizes = [2, 128], strides = [1, 1]} : vector<2x256xf32> to vector<2x128xf32>
    %c6_155 = arith.constant 6 : index
    %c0_156 = arith.constant 0 : index
    %c0_157 = arith.constant 0 : index
    %403 = vector.load %arg17[%c6_155, %c0_156, %c0_157] : memref<8x2x128xf32, #tpu.memory_space<vmem>>, vector<1x2x128xf32>
    %404 = vector.shape_cast %403 : vector<1x2x128xf32> to vector<2x128xf32>
    %405 = arith.addf %402, %404 : vector<2x128xf32>
    %406 = vector.broadcast %77 : vector<1x128xf32> to vector<2x128xf32>
    %407 = arith.mulf %405, %406 : vector<2x128xf32>
    %408 = math.tanh %407 : vector<2x128xf32>
    %409 = vector.extract_strided_slice %408 {offsets = [0, 0], sizes = [2, 32], strides = [1, 1]} : vector<2x128xf32> to vector<2x32xf32>
    %cst_158 = arith.constant 5.000000e-01 : f32
    %410 = vector.broadcast %cst_158 : f32 to vector<2x32xf32>
    %411 = arith.mulf %409, %410 : vector<2x32xf32>
    %cst_159 = arith.constant 5.000000e-01 : f32
    %412 = vector.broadcast %cst_159 : f32 to vector<2x32xf32>
    %413 = arith.addf %411, %412 : vector<2x32xf32>
    %414 = vector.extract_strided_slice %408 {offsets = [0, 32], sizes = [2, 32], strides = [1, 1]} : vector<2x128xf32> to vector<2x32xf32>
    %cst_160 = arith.constant 5.000000e-01 : f32
    %415 = vector.broadcast %cst_160 : f32 to vector<2x32xf32>
    %416 = arith.mulf %414, %415 : vector<2x32xf32>
    %cst_161 = arith.constant 5.000000e-01 : f32
    %417 = vector.broadcast %cst_161 : f32 to vector<2x32xf32>
    %418 = arith.addf %416, %417 : vector<2x32xf32>
    %419 = vector.extract_strided_slice %408 {offsets = [0, 64], sizes = [2, 32], strides = [1, 1]} : vector<2x128xf32> to vector<2x32xf32>
    %420 = vector.extract_strided_slice %408 {offsets = [0, 96], sizes = [2, 32], strides = [1, 1]} : vector<2x128xf32> to vector<2x32xf32>
    %cst_162 = arith.constant 5.000000e-01 : f32
    %421 = vector.broadcast %cst_162 : f32 to vector<2x32xf32>
    %422 = arith.mulf %420, %421 : vector<2x32xf32>
    %cst_163 = arith.constant 5.000000e-01 : f32
    %423 = vector.broadcast %cst_163 : f32 to vector<2x32xf32>
    %424 = arith.addf %422, %423 : vector<2x32xf32>
    %425 = arith.mulf %418, %369 : vector<2x32xf32>
    %426 = arith.mulf %413, %419 : vector<2x32xf32>
    %427 = arith.addf %425, %426 : vector<2x32xf32>
    %428 = math.tanh %427 : vector<2x32xf32>
    %429 = arith.mulf %424, %428 : vector<2x32xf32>
    %430 = vector.extract_strided_slice %401 {offsets = [0, 128], sizes = [2, 128], strides = [1, 1]} : vector<2x256xf32> to vector<2x128xf32>
    %431 = vector.broadcast %79 : vector<1x128xf32> to vector<2x128xf32>
    %432 = arith.addf %430, %431 : vector<2x128xf32>
    %433 = vector.broadcast %77 : vector<1x128xf32> to vector<2x128xf32>
    %434 = arith.mulf %432, %433 : vector<2x128xf32>
    %435 = math.tanh %434 : vector<2x128xf32>
    %436 = vector.extract_strided_slice %435 {offsets = [0, 0], sizes = [2, 32], strides = [1, 1]} : vector<2x128xf32> to vector<2x32xf32>
    %cst_164 = arith.constant 5.000000e-01 : f32
    %437 = vector.broadcast %cst_164 : f32 to vector<2x32xf32>
    %438 = arith.mulf %436, %437 : vector<2x32xf32>
    %cst_165 = arith.constant 5.000000e-01 : f32
    %439 = vector.broadcast %cst_165 : f32 to vector<2x32xf32>
    %440 = arith.addf %438, %439 : vector<2x32xf32>
    %441 = vector.extract_strided_slice %435 {offsets = [0, 32], sizes = [2, 32], strides = [1, 1]} : vector<2x128xf32> to vector<2x32xf32>
    %cst_166 = arith.constant 5.000000e-01 : f32
    %442 = vector.broadcast %cst_166 : f32 to vector<2x32xf32>
    %443 = arith.mulf %441, %442 : vector<2x32xf32>
    %cst_167 = arith.constant 5.000000e-01 : f32
    %444 = vector.broadcast %cst_167 : f32 to vector<2x32xf32>
    %445 = arith.addf %443, %444 : vector<2x32xf32>
    %446 = vector.extract_strided_slice %435 {offsets = [0, 64], sizes = [2, 32], strides = [1, 1]} : vector<2x128xf32> to vector<2x32xf32>
    %447 = vector.extract_strided_slice %435 {offsets = [0, 96], sizes = [2, 32], strides = [1, 1]} : vector<2x128xf32> to vector<2x32xf32>
    %cst_168 = arith.constant 5.000000e-01 : f32
    %448 = vector.broadcast %cst_168 : f32 to vector<2x32xf32>
    %449 = arith.mulf %447, %448 : vector<2x32xf32>
    %cst_169 = arith.constant 5.000000e-01 : f32
    %450 = vector.broadcast %cst_169 : f32 to vector<2x32xf32>
    %451 = arith.addf %449, %450 : vector<2x32xf32>
    %452 = arith.mulf %445, %396 : vector<2x32xf32>
    %453 = arith.mulf %440, %446 : vector<2x32xf32>
    %454 = arith.addf %452, %453 : vector<2x32xf32>
    %455 = math.tanh %454 : vector<2x32xf32>
    %456 = arith.mulf %451, %455 : vector<2x32xf32>
    %457 = tpu.concatenate %429, %456 in 1 : vector<2x32xf32>, vector<2x32xf32> -> vector<2x64xf32>
    %458 = arith.truncf %457 : vector<2x64xf32> to vector<2x64xbf16>
    %cst_170 = arith.constant dense<0.000000e+00> : vector<2x256xf32>
    %459 = tpu.matmul %458, %78, %cst_170 {dimension_numbers = #tpu.dot_dimension_numbers<[1], [0], [0], [1], [0, 0, 1, 1], [], []>} : vector<2x64xbf16>, vector<64x256xbf16>, vector<2x256xf32> -> vector<2x256xf32>
    %460 = vector.extract_strided_slice %459 {offsets = [0, 0], sizes = [2, 128], strides = [1, 1]} : vector<2x256xf32> to vector<2x128xf32>
    %c7_171 = arith.constant 7 : index
    %c0_172 = arith.constant 0 : index
    %c0_173 = arith.constant 0 : index
    %461 = vector.load %arg17[%c7_171, %c0_172, %c0_173] : memref<8x2x128xf32, #tpu.memory_space<vmem>>, vector<1x2x128xf32>
    %462 = vector.shape_cast %461 : vector<1x2x128xf32> to vector<2x128xf32>
    %463 = arith.addf %460, %462 : vector<2x128xf32>
    %464 = vector.broadcast %77 : vector<1x128xf32> to vector<2x128xf32>
    %465 = arith.mulf %463, %464 : vector<2x128xf32>
    %466 = math.tanh %465 : vector<2x128xf32>
    %467 = vector.extract_strided_slice %466 {offsets = [0, 0], sizes = [2, 32], strides = [1, 1]} : vector<2x128xf32> to vector<2x32xf32>
    %cst_174 = arith.constant 5.000000e-01 : f32
    %468 = vector.broadcast %cst_174 : f32 to vector<2x32xf32>
    %469 = arith.mulf %467, %468 : vector<2x32xf32>
    %cst_175 = arith.constant 5.000000e-01 : f32
    %470 = vector.broadcast %cst_175 : f32 to vector<2x32xf32>
    %471 = arith.addf %469, %470 : vector<2x32xf32>
    %472 = vector.extract_strided_slice %466 {offsets = [0, 32], sizes = [2, 32], strides = [1, 1]} : vector<2x128xf32> to vector<2x32xf32>
    %cst_176 = arith.constant 5.000000e-01 : f32
    %473 = vector.broadcast %cst_176 : f32 to vector<2x32xf32>
    %474 = arith.mulf %472, %473 : vector<2x32xf32>
    %cst_177 = arith.constant 5.000000e-01 : f32
    %475 = vector.broadcast %cst_177 : f32 to vector<2x32xf32>
    %476 = arith.addf %474, %475 : vector<2x32xf32>
    %477 = vector.extract_strided_slice %466 {offsets = [0, 64], sizes = [2, 32], strides = [1, 1]} : vector<2x128xf32> to vector<2x32xf32>
    %478 = vector.extract_strided_slice %466 {offsets = [0, 96], sizes = [2, 32], strides = [1, 1]} : vector<2x128xf32> to vector<2x32xf32>
    %cst_178 = arith.constant 5.000000e-01 : f32
    %479 = vector.broadcast %cst_178 : f32 to vector<2x32xf32>
    %480 = arith.mulf %478, %479 : vector<2x32xf32>
    %cst_179 = arith.constant 5.000000e-01 : f32
    %481 = vector.broadcast %cst_179 : f32 to vector<2x32xf32>
    %482 = arith.addf %480, %481 : vector<2x32xf32>
    %483 = arith.mulf %476, %427 : vector<2x32xf32>
    %484 = arith.mulf %471, %477 : vector<2x32xf32>
    %485 = arith.addf %483, %484 : vector<2x32xf32>
    %486 = math.tanh %485 : vector<2x32xf32>
    %487 = arith.mulf %482, %486 : vector<2x32xf32>
    %488 = vector.extract_strided_slice %459 {offsets = [0, 128], sizes = [2, 128], strides = [1, 1]} : vector<2x256xf32> to vector<2x128xf32>
    %489 = vector.broadcast %79 : vector<1x128xf32> to vector<2x128xf32>
    %490 = arith.addf %488, %489 : vector<2x128xf32>
    %491 = vector.broadcast %77 : vector<1x128xf32> to vector<2x128xf32>
    %492 = arith.mulf %490, %491 : vector<2x128xf32>
    %493 = math.tanh %492 : vector<2x128xf32>
    %494 = vector.extract_strided_slice %493 {offsets = [0, 0], sizes = [2, 32], strides = [1, 1]} : vector<2x128xf32> to vector<2x32xf32>
    %cst_180 = arith.constant 5.000000e-01 : f32
    %495 = vector.broadcast %cst_180 : f32 to vector<2x32xf32>
    %496 = arith.mulf %494, %495 : vector<2x32xf32>
    %cst_181 = arith.constant 5.000000e-01 : f32
    %497 = vector.broadcast %cst_181 : f32 to vector<2x32xf32>
    %498 = arith.addf %496, %497 : vector<2x32xf32>
    %499 = vector.extract_strided_slice %493 {offsets = [0, 32], sizes = [2, 32], strides = [1, 1]} : vector<2x128xf32> to vector<2x32xf32>
    %cst_182 = arith.constant 5.000000e-01 : f32
    %500 = vector.broadcast %cst_182 : f32 to vector<2x32xf32>
    %501 = arith.mulf %499, %500 : vector<2x32xf32>
    %cst_183 = arith.constant 5.000000e-01 : f32
    %502 = vector.broadcast %cst_183 : f32 to vector<2x32xf32>
    %503 = arith.addf %501, %502 : vector<2x32xf32>
    %504 = vector.extract_strided_slice %493 {offsets = [0, 64], sizes = [2, 32], strides = [1, 1]} : vector<2x128xf32> to vector<2x32xf32>
    %505 = vector.extract_strided_slice %493 {offsets = [0, 96], sizes = [2, 32], strides = [1, 1]} : vector<2x128xf32> to vector<2x32xf32>
    %cst_184 = arith.constant 5.000000e-01 : f32
    %506 = vector.broadcast %cst_184 : f32 to vector<2x32xf32>
    %507 = arith.mulf %505, %506 : vector<2x32xf32>
    %cst_185 = arith.constant 5.000000e-01 : f32
    %508 = vector.broadcast %cst_185 : f32 to vector<2x32xf32>
    %509 = arith.addf %507, %508 : vector<2x32xf32>
    %510 = arith.mulf %503, %454 : vector<2x32xf32>
    %511 = arith.mulf %498, %504 : vector<2x32xf32>
    %512 = arith.addf %510, %511 : vector<2x32xf32>
    %513 = math.tanh %512 : vector<2x32xf32>
    %514 = arith.mulf %509, %513 : vector<2x32xf32>
    %515 = tpu.concatenate %487, %514 in 1 : vector<2x32xf32>, vector<2x32xf32> -> vector<2x64xf32>
    %516 = arith.truncf %515 : vector<2x64xf32> to vector<2x64xbf16>
    %cst_186 = arith.constant dense<0.000000e+00> : vector<2x256xf32>
    %517 = tpu.matmul %516, %78, %cst_186 {dimension_numbers = #tpu.dot_dimension_numbers<[1], [0], [0], [1], [0, 0, 1, 1], [], []>} : vector<2x64xbf16>, vector<64x256xbf16>, vector<2x256xf32> -> vector<2x256xf32>
    %518 = vector.extract_strided_slice %517 {offsets = [0, 128], sizes = [2, 128], strides = [1, 1]} : vector<2x256xf32> to vector<2x128xf32>
    %519 = vector.broadcast %79 : vector<1x128xf32> to vector<2x128xf32>
    %520 = arith.addf %518, %519 : vector<2x128xf32>
    %521 = vector.broadcast %77 : vector<1x128xf32> to vector<2x128xf32>
    %522 = arith.mulf %520, %521 : vector<2x128xf32>
    %523 = math.tanh %522 : vector<2x128xf32>
    %524 = vector.extract_strided_slice %523 {offsets = [0, 0], sizes = [2, 32], strides = [1, 1]} : vector<2x128xf32> to vector<2x32xf32>
    %cst_187 = arith.constant 5.000000e-01 : f32
    %525 = vector.broadcast %cst_187 : f32 to vector<2x32xf32>
    %526 = arith.mulf %524, %525 : vector<2x32xf32>
    %cst_188 = arith.constant 5.000000e-01 : f32
    %527 = vector.broadcast %cst_188 : f32 to vector<2x32xf32>
    %528 = arith.addf %526, %527 : vector<2x32xf32>
    %529 = vector.extract_strided_slice %523 {offsets = [0, 32], sizes = [2, 32], strides = [1, 1]} : vector<2x128xf32> to vector<2x32xf32>
    %cst_189 = arith.constant 5.000000e-01 : f32
    %530 = vector.broadcast %cst_189 : f32 to vector<2x32xf32>
    %531 = arith.mulf %529, %530 : vector<2x32xf32>
    %cst_190 = arith.constant 5.000000e-01 : f32
    %532 = vector.broadcast %cst_190 : f32 to vector<2x32xf32>
    %533 = arith.addf %531, %532 : vector<2x32xf32>
    %534 = vector.extract_strided_slice %523 {offsets = [0, 64], sizes = [2, 32], strides = [1, 1]} : vector<2x128xf32> to vector<2x32xf32>
    %535 = vector.extract_strided_slice %523 {offsets = [0, 96], sizes = [2, 32], strides = [1, 1]} : vector<2x128xf32> to vector<2x32xf32>
    %cst_191 = arith.constant 5.000000e-01 : f32
    %536 = vector.broadcast %cst_191 : f32 to vector<2x32xf32>
    %537 = arith.mulf %535, %536 : vector<2x32xf32>
    %cst_192 = arith.constant 5.000000e-01 : f32
    %538 = vector.broadcast %cst_192 : f32 to vector<2x32xf32>
    %539 = arith.addf %537, %538 : vector<2x32xf32>
    %540 = arith.mulf %533, %512 : vector<2x32xf32>
    %541 = arith.mulf %528, %534 : vector<2x32xf32>
    %542 = arith.addf %540, %541 : vector<2x32xf32>
    %543 = math.tanh %542 : vector<2x32xf32>
    %544 = arith.mulf %539, %543 : vector<2x32xf32>
    %545 = arith.truncf %544 : vector<2x32xf32> to vector<2x32xbf16>
    %c0_193 = arith.constant 0 : index
    %c0_194 = arith.constant 0 : index
    %546 = vector.load %arg10[%c0_193, %c0_194] : memref<32x64xbf16, #tpu.memory_space<vmem>>, vector<32x64xbf16>
    %cst_195 = arith.constant dense<0.000000e+00> : vector<2x64xf32>
    %547 = tpu.matmul %545, %546, %cst_195 {dimension_numbers = #tpu.dot_dimension_numbers<[1], [0], [0], [1], [0, 0, 1, 1], [], []>} : vector<2x32xbf16>, vector<32x64xbf16>, vector<2x64xf32> -> vector<2x64xf32>
    %c0_196 = arith.constant 0 : index
    %c0_197 = arith.constant 0 : index
    %548 = vector.load %arg11[%c0_196, %c0_197] : memref<1x64xf32, #tpu.memory_space<vmem>>, vector<1x64xf32>
    %549 = vector.broadcast %548 : vector<1x64xf32> to vector<2x64xf32>
    %550 = arith.addf %547, %549 : vector<2x64xf32>
    %cst_198 = arith.constant 0.000000e+00 : f32
    %551 = vector.broadcast %cst_198 : f32 to vector<2x64xf32>
    %552 = arith.maximumf %550, %551 : vector<2x64xf32>
    %553 = arith.truncf %552 : vector<2x64xf32> to vector<2x64xbf16>
    %c0_199 = arith.constant 0 : index
    %c0_200 = arith.constant 0 : index
    %554 = vector.load %arg12[%c0_199, %c0_200] : memref<64x43xbf16, #tpu.memory_space<vmem>>, vector<64x43xbf16>
    %cst_201 = arith.constant dense<0.000000e+00> : vector<2x43xf32>
    %555 = tpu.matmul %553, %554, %cst_201 {dimension_numbers = #tpu.dot_dimension_numbers<[1], [0], [0], [1], [0, 0, 1, 1], [], []>} : vector<2x64xbf16>, vector<64x43xbf16>, vector<2x43xf32> -> vector<2x43xf32>
    %c0_202 = arith.constant 0 : index
    %c0_203 = arith.constant 0 : index
    %556 = vector.load %arg13[%c0_202, %c0_203] : memref<1x43xf32, #tpu.memory_space<vmem>>, vector<1x43xf32>
    %557 = vector.broadcast %556 : vector<1x43xf32> to vector<2x43xf32>
    %558 = arith.addf %555, %557 : vector<2x43xf32>
    %559 = tpu.iota {dimensions = array<i32: 1>} : vector<2x43xi32>
    %c35_i32 = arith.constant 35 : i32
    %560 = vector.broadcast %c35_i32 : i32 to vector<2x43xi32>
    %561 = arith.cmpi sge, %559, %560 : vector<2x43xi32>
    %cst_204 = arith.constant 5.000000e-01 : f32
    %562 = vector.broadcast %cst_204 : f32 to vector<2x43xf32>
    %563 = arith.mulf %562, %558 : vector<2x43xf32>
    %564 = math.tanh %563 : vector<2x43xf32>
    %cst_205 = arith.constant 5.000000e-01 : f32
    %565 = vector.broadcast %cst_205 : f32 to vector<2x43xf32>
    %566 = arith.mulf %565, %564 : vector<2x43xf32>
    %cst_206 = arith.constant 5.000000e-01 : f32
    %567 = vector.broadcast %cst_206 : f32 to vector<2x43xf32>
    %568 = arith.addf %566, %567 : vector<2x43xf32>
    %569 = arith.select %561, %568, %558 : vector<2x43xi1>, vector<2x43xf32>
    %c0_207 = arith.constant 0 : index
    %c0_208 = arith.constant 0 : index
    %570 = vector.load %arg14[%c0_207, %c0_208] : memref<2x43xf32, #tpu.memory_space<vmem>>, vector<2x43xf32>
    tpu.vector_store %arg14[%c0_207, %c0_208], %569 {strides = array<i32>} : memref<2x43xf32, #tpu.memory_space<vmem>>, vector<2x43xf32>,
    %c0_209 = arith.constant 0 : index
    %c0_210 = arith.constant 0 : index
    %c0_211 = arith.constant 0 : index
    %571 = vector.load %arg15[%c0_209, %c0_210, %c0_211] : memref<2x2x32xf32, #tpu.memory_space<vmem>>, vector<1x2x32xf32>
    %572 = vector.shape_cast %571 : vector<1x2x32xf32> to vector<2x32xf32>
    %573 = vector.shape_cast %487 : vector<2x32xf32> to vector<1x2x32xf32>
    tpu.vector_store %arg15[%c0_209, %c0_210, %c0_211], %573 {strides = array<i32>} : memref<2x2x32xf32, #tpu.memory_space<vmem>>, vector<1x2x32xf32>,
    %c1_212 = arith.constant 1 : index
    %c0_213 = arith.constant 0 : index
    %c0_214 = arith.constant 0 : index
    %574 = vector.load %arg15[%c1_212, %c0_213, %c0_214] : memref<2x2x32xf32, #tpu.memory_space<vmem>>, vector<1x2x32xf32>
    %575 = vector.shape_cast %574 : vector<1x2x32xf32> to vector<2x32xf32>
    %576 = vector.shape_cast %544 : vector<2x32xf32> to vector<1x2x32xf32>
    tpu.vector_store %arg15[%c1_212, %c0_213, %c0_214], %576 {strides = array<i32>} : memref<2x2x32xf32, #tpu.memory_space<vmem>>, vector<1x2x32xf32>,
    %c0_215 = arith.constant 0 : index
    %c0_216 = arith.constant 0 : index
    %c0_217 = arith.constant 0 : index
    %577 = vector.load %arg16[%c0_215, %c0_216, %c0_217] : memref<2x2x32xf32, #tpu.memory_space<vmem>>, vector<1x2x32xf32>
    %578 = vector.shape_cast %577 : vector<1x2x32xf32> to vector<2x32xf32>
    %579 = vector.shape_cast %485 : vector<2x32xf32> to vector<1x2x32xf32>
    tpu.vector_store %arg16[%c0_215, %c0_216, %c0_217], %579 {strides = array<i32>} : memref<2x2x32xf32, #tpu.memory_space<vmem>>, vector<1x2x32xf32>,
    %c1_218 = arith.constant 1 : index
    %c0_219 = arith.constant 0 : index
    %c0_220 = arith.constant 0 : index
    %580 = vector.load %arg16[%c1_218, %c0_219, %c0_220] : memref<2x2x32xf32, #tpu.memory_space<vmem>>, vector<1x2x32xf32>
    %581 = vector.shape_cast %580 : vector<1x2x32xf32> to vector<2x32xf32>
    %582 = vector.shape_cast %542 : vector<2x32xf32> to vector<1x2x32xf32>
    tpu.vector_store %arg16[%c1_218, %c0_219, %c0_220], %582 {strides = array<i32>} : memref<2x2x32xf32, #tpu.memory_space<vmem>>, vector<1x2x32xf32>,
    return
  }
  func.func @transform_0(%arg0: i32, %arg1: memref<2x8xi32, #tpu.memory_space<smem>>) -> (i32, i32, i32) {
    %c0_i32 = arith.constant 0 : i32
    %c0_i32_0 = arith.constant 0 : i32
    %c0_i32_1 = arith.constant 0 : i32
    %c0_i32_2 = arith.constant 0 : i32
    return %c0_i32, %c0_i32_0, %c0_i32_1 : i32, i32, i32
  }
  func.func @transform_1(%arg0: i32, %arg1: memref<2x8xi32, #tpu.memory_space<smem>>) -> (i32, i32) {
    %c0_i32 = arith.constant 0 : i32
    %c0_i32_0 = arith.constant 0 : i32
    %c0_i32_1 = arith.constant 0 : i32
    return %c0_i32, %c0_i32_0 : i32, i32
  }
  func.func @transform_2(%arg0: i32, %arg1: memref<2x8xi32, #tpu.memory_space<smem>>) -> (i32, i32) {
    %c0_i32 = arith.constant 0 : i32
    %c0_i32_0 = arith.constant 0 : i32
    %c0_i32_1 = arith.constant 0 : i32
    return %c0_i32, %c0_i32_0 : i32, i32
  }
  func.func @transform_3(%arg0: i32, %arg1: memref<2x8xi32, #tpu.memory_space<smem>>) -> (i32, i32) {
    %c0_i32 = arith.constant 0 : i32
    %c0_i32_0 = arith.constant 0 : i32
    %c0_i32_1 = arith.constant 0 : i32
    return %c0_i32, %c0_i32_0 : i32, i32
  }
  func.func @transform_4(%arg0: i32, %arg1: memref<2x8xi32, #tpu.memory_space<smem>>) -> (i32, i32) {
    %c0_i32 = arith.constant 0 : i32
    %c0_i32_0 = arith.constant 0 : i32
    %c0_i32_1 = arith.constant 0 : i32
    return %c0_i32, %c0_i32_0 : i32, i32
  }
  func.func @transform_5(%arg0: i32, %arg1: memref<2x8xi32, #tpu.memory_space<smem>>) -> (i32, i32) {
    %c0_i32 = arith.constant 0 : i32
    %c0_i32_0 = arith.constant 0 : i32
    %c0_i32_1 = arith.constant 0 : i32
    return %c0_i32, %c0_i32_0 : i32, i32
  }
  func.func @transform_6(%arg0: i32, %arg1: memref<2x8xi32, #tpu.memory_space<smem>>) -> (i32, i32) {
    %c0_i32 = arith.constant 0 : i32
    %c0_i32_0 = arith.constant 0 : i32
    %c0_i32_1 = arith.constant 0 : i32
    return %c0_i32, %c0_i32_0 : i32, i32
  }
  func.func @transform_7(%arg0: i32, %arg1: memref<2x8xi32, #tpu.memory_space<smem>>) -> (i32, i32) {
    %c0_i32 = arith.constant 0 : i32
    %c0_i32_0 = arith.constant 0 : i32
    %c0_i32_1 = arith.constant 0 : i32
    return %c0_i32, %c0_i32_0 : i32, i32
  }
  func.func @transform_8(%arg0: i32, %arg1: memref<2x8xi32, #tpu.memory_space<smem>>) -> (i32, i32) {
    %c0_i32 = arith.constant 0 : i32
    %c0_i32_0 = arith.constant 0 : i32
    %c0_i32_1 = arith.constant 0 : i32
    return %c0_i32, %c0_i32_0 : i32, i32
  }
  func.func @transform_9(%arg0: i32, %arg1: memref<2x8xi32, #tpu.memory_space<smem>>) -> (i32, i32) {
    %c0_i32 = arith.constant 0 : i32
    %c0_i32_0 = arith.constant 0 : i32
    %c0_i32_1 = arith.constant 0 : i32
    return %c0_i32, %c0_i32_0 : i32, i32
  }
  func.func @transform_10(%arg0: i32, %arg1: memref<2x8xi32, #tpu.memory_space<smem>>) -> (i32, i32) {
    %c0_i32 = arith.constant 0 : i32
    %c0_i32_0 = arith.constant 0 : i32
    %c0_i32_1 = arith.constant 0 : i32
    return %c0_i32, %c0_i32_0 : i32, i32
  }
  func.func @transform_11(%arg0: i32, %arg1: memref<2x8xi32, #tpu.memory_space<smem>>) -> (i32, i32) {
    %c0_i32 = arith.constant 0 : i32
    %c0_i32_0 = arith.constant 0 : i32
    %c0_i32_1 = arith.constant 0 : i32
    return %c0_i32, %c0_i32_0 : i32, i32
  }
  func.func @transform_12(%arg0: i32, %arg1: memref<2x8xi32, #tpu.memory_space<smem>>) -> (i32, i32) {
    %c0_i32 = arith.constant 0 : i32
    %c0_i32_0 = arith.constant 0 : i32
    %c0_i32_1 = arith.constant 0 : i32
    return %c0_i32, %c0_i32_0 : i32, i32
  }
  func.func @transform_13(%arg0: i32, %arg1: memref<2x8xi32, #tpu.memory_space<smem>>) -> (i32, i32, i32) {
    %c0_i32 = arith.constant 0 : i32
    %c0_i32_0 = arith.constant 0 : i32
    %c0_i32_1 = arith.constant 0 : i32
    %c0_i32_2 = arith.constant 0 : i32
    return %c0_i32, %c0_i32_0, %c0_i32_1 : i32, i32, i32
  }
  func.func @transform_14(%arg0: i32, %arg1: memref<2x8xi32, #tpu.memory_space<smem>>) -> (i32, i32, i32) {
    %c0_i32 = arith.constant 0 : i32
    %c0_i32_0 = arith.constant 0 : i32
    %c0_i32_1 = arith.constant 0 : i32
    %c0_i32_2 = arith.constant 0 : i32
    return %c0_i32, %c0_i32_0, %c0_i32_1 : i32, i32, i32
  }
}

</mosaic_0001>

<llo_original>
// kernel: tpu_custom_call.1
$region0: #{tpu_custom_call.1}
  #allocation0 [shape = 'u32[]', space=smem, size = 0x4, offset = 0x4, fixed_abs, tag = 'smem constant byte address 0x4 - core index']
  #allocation1 [shape = 'u32[72,128]{1,0:T(1,128)}', space=vmem, size = 0x9000, scoped, tag = 'internal scratch']
  #allocation2 [shape = 'f32[8,2,128]{2,1,0:T(2,128)}', space=vmem, size = 0x2000, scoped, tag = 'scratch operand']
  #allocation3 [shape = 's32[1]{0}', space=sflag, size = 0x4, scoped, tag = 'scoped memory for tpu_custom_call.1']
  #allocation4 [shape = 'u8[1024]{0}', space=smem, size = 0x400, scoped, tag = 'prefetched SMEM operand 0']
  %s0 = inlined_call_operand.vmem [shape: s32[2,8], index: 0, kind: input, shape index: {}]
  %s1 = inlined_call_operand.hbm [shape: f32[2,8,43], index: 1, kind: input, shape index: {}]
  %s2 = inlined_call_operand.vmem [shape: bf16[43,56], index: 2, kind: input, shape index: {}]
  %s3 = inlined_call_operand.vmem [shape: f32[1,56], index: 3, kind: input, shape index: {}]
  %s4 = inlined_call_operand.vmem [shape: bf16[56,128], index: 4, kind: input, shape index: {}]
  %s5 = inlined_call_operand.vmem [shape: f32[1,128], index: 5, kind: input, shape index: {}]
  %s6 = inlined_call_operand.hbm [shape: f32[16,128], index: 6, kind: input, shape index: {}]
  %s7 = inlined_call_operand.hbm [shape: bf16[64,256], index: 7, kind: input, shape index: {}]
  %s8 = inlined_call_operand.vmem [shape: f32[1,128], index: 8, kind: input, shape index: {}]
  %s9 = inlined_call_operand.hbm [shape: bf16[32,64], index: 9, kind: input, shape index: {}]
  %s10 = inlined_call_operand.vmem [shape: f32[1,64], index: 10, kind: input, shape index: {}]
  %s11 = inlined_call_operand.vmem [shape: bf16[64,43], index: 11, kind: input, shape index: {}]
  %s12 = inlined_call_operand.vmem [shape: f32[1,43], index: 12, kind: input, shape index: {}]
  %s13 = inlined_call_operand.hbm [shape: f32[2,43], index: 13, kind: output, shape index: {0}]
  %s14 = inlined_call_operand.hbm [shape: f32[2,2,32], index: 14, kind: output, shape index: {1}]
  %s15 = inlined_call_operand.hbm [shape: f32[2,2,32], index: 15, kind: output, shape index: {2}]
  %16 = xla_tuple %s13, %s14, %s15
  %s17 = sld [smem:[#allocation0]]
  $region90: #{tpu_custom_call.1} parent=0
    _
  %s19 = ssub.s32 1, %s17
  %s20 = scalar_select 0, %s19, %s17
  %s22 = sshll.u32 %s0, 4
  %s23 = int_to_ptr.vmem [resolvable:$true] %s22
  %25 = dma.vmem_to_smem %s23, 32, [#allocation4], [#allocation3]
  %27 = dma.done [#allocation3], 32
  %28 = sfence
  $region1: #{tpu_custom_call.1} parent=0
    #allocation5 [shape = 'u8[8192]{0}', space=vmem, size = 0x2000, scoped, tag = 'input window, operand 1, single buffered']
    #allocation6 [shape = 's32[1]{0}', space=sflag, size = 0x4, scoped, tag = 'scoped memory for tpu_custom_call.1']
    #allocation7 [shape = 's32[1]{0}', space=sflag, size = 0x4, scoped, tag = 'scoped memory for tpu_custom_call.1']
    #allocation8 [shape = 'u8[8192]{0}', space=vmem, size = 0x2000, scoped, tag = 'input window, operand 6, single buffered']
    #allocation9 [shape = 's32[1]{0}', space=sflag, size = 0x4, scoped, tag = 'scoped memory for tpu_custom_call.1']
    #allocation10 [shape = 'u8[32768]{0}', space=vmem, size = 0x8000, scoped, tag = 'input window, operand 7, single buffered']
    #allocation11 [shape = 'u8[8192]{0}', space=vmem, size = 0x2000, scoped, tag = 'input window, operand 9, single buffered']
    #allocation12 [shape = 's32[1]{0}', space=sflag, size = 0x4, scoped, tag = 'scoped memory for tpu_custom_call.1']
    #allocation13 [shape = 'u8[1024]{0}', space=vmem, size = 0x400, scoped, tag = 'output window, operand 0, single buffered']
    #allocation14 [shape = 'u8[2048]{0}', space=vmem, size = 0x800, scoped, tag = 'output window, operand 1, single buffered']
    #allocation15 [shape = 's32[1]{0}', space=sflag, size = 0x4, scoped, tag = 'scoped memory for tpu_custom_call.1']
    #allocation16 [shape = 'u8[2048]{0}', space=vmem, size = 0x800, scoped, tag = 'output window, operand 2, single buffered']
    %29 = vsyncpa [#allocation6], 0
    %30 = vsyncpa [#allocation9], 0
    %31 = vsyncpa [#allocation12], 0
    %32 = vsyncpa [#allocation7], 0
    %33 = vsyncpa [#allocation15], 0
    // Predicated region
    $region2: #{tpu_custom_call.1} parent=1 // pred_check
      _
    $region3: #{tpu_custom_call.1} parent=1 // pred_check_branch
      %35 = sbr.rel (0) target = $region5
    $region4: #{tpu_custom_call.1} parent=1 // pred_region
      %37 = vsyncadd [#allocation6], 0
      %s38 = sshll.u32 %s1, 4
      %s39 = int_to_ptr.hbm [resolvable:$true] %s38
      %s40 = sshll.u32 [#allocation5], 4
      %s41 = int_to_ptr.vmem [resolvable:$true] %s40
      %46 = dma.hbm_to_vmem [thread:$0]  %s39, 256, %s41, [#allocation6], 128, 128, 8
    $region5: #{tpu_custom_call.1} parent=1 // pred_fallthru
      _
    // Predicated region
    $region6: #{tpu_custom_call.1} parent=1 // pred_check
      _
    $region7: #{tpu_custom_call.1} parent=1 // pred_check_branch
      %48 = sbr.rel (0) target = $region9
    $region8: #{tpu_custom_call.1} parent=1 // pred_region
      _
    $region9: #{tpu_custom_call.1} parent=1 // pred_fallthru
      _
    // Predicated region
    $region10: #{tpu_custom_call.1} parent=1 // pred_check
      _
    $region11: #{tpu_custom_call.1} parent=1 // pred_check_branch
      %50 = sbr.rel (0) target = $region13
    $region12: #{tpu_custom_call.1} parent=1 // pred_region
      _
    $region13: #{tpu_custom_call.1} parent=1 // pred_fallthru
      _
    // Predicated region
    $region14: #{tpu_custom_call.1} parent=1 // pred_check
      _
    $region15: #{tpu_custom_call.1} parent=1 // pred_check_branch
      %52 = sbr.rel (0) target = $region17
    $region16: #{tpu_custom_call.1} parent=1 // pred_region
      _
    $region17: #{tpu_custom_call.1} parent=1 // pred_fallthru
      _
    // Predicated region
    $region18: #{tpu_custom_call.1} parent=1 // pred_check
      _
    $region19: #{tpu_custom_call.1} parent=1 // pred_check_branch
      %54 = sbr.rel (0) target = $region21
    $region20: #{tpu_custom_call.1} parent=1 // pred_region
      _
    $region21: #{tpu_custom_call.1} parent=1 // pred_fallthru
      _
    // Predicated region
    $region22: #{tpu_custom_call.1} parent=1 // pred_check
      _
    $region23: #{tpu_custom_call.1} parent=1 // pred_check_branch
      %56 = sbr.rel (0) target = $region25
    $region24: #{tpu_custom_call.1} parent=1 // pred_region
      %58 = vsyncadd [#allocation9], 0
      %s59 = sshll.u32 %s6, 4
      %s60 = int_to_ptr.hbm [resolvable:$true] %s59
      %s61 = sshll.u32 [#allocation8], 4
      %s62 = int_to_ptr.vmem [resolvable:$true] %s61
      %67 = dma.hbm_to_vmem [thread:$0]  %s60, 256, %s62, [#allocation9], 128, 128, 8
    $region25: #{tpu_custom_call.1} parent=1 // pred_fallthru
      _
    // Predicated region
    $region26: #{tpu_custom_call.1} parent=1 // pred_check
      _
    $region27: #{tpu_custom_call.1} parent=1 // pred_check_branch
      %69 = sbr.rel (0) target = $region29
    $region28: #{tpu_custom_call.1} parent=1 // pred_region
      %71 = vsyncadd [#allocation9], 0
      %s72 = sshll.u32 %s7, 4
      %s73 = int_to_ptr.hbm [resolvable:$true] %s72
      %s74 = sshll.u32 [#allocation10], 4
      %s75 = int_to_ptr.vmem [resolvable:$true] %s74
      %80 = dma.hbm_to_vmem [thread:$0]  %s73, 1024, %s75, [#allocation9], 128, 128, 8
    $region29: #{tpu_custom_call.1} parent=1 // pred_fallthru
      _
    // Predicated region
    $region30: #{tpu_custom_call.1} parent=1 // pred_check
      _
    $region31: #{tpu_custom_call.1} parent=1 // pred_check_branch
      %82 = sbr.rel (0) target = $region33
    $region32: #{tpu_custom_call.1} parent=1 // pred_region
      _
    $region33: #{tpu_custom_call.1} parent=1 // pred_fallthru
      _
    // Predicated region
    $region34: #{tpu_custom_call.1} parent=1 // pred_check
      _
    $region35: #{tpu_custom_call.1} parent=1 // pred_check_branch
      %84 = sbr.rel (0) target = $region37
    $region36: #{tpu_custom_call.1} parent=1 // pred_region
      %86 = vsyncadd [#allocation12], 0
      %s87 = sshll.u32 %s9, 4
      %s88 = int_to_ptr.hbm [resolvable:$true] %s87
      %s89 = sshll.u32 [#allocation11], 4
      %s90 = int_to_ptr.vmem [resolvable:$true] %s89
      %95 = dma.hbm_to_vmem [thread:$0]  %s88, 256, %s90, [#allocation12], 64, 64, 4
    $region37: #{tpu_custom_call.1} parent=1 // pred_fallthru
      _
    // Predicated region
    $region38: #{tpu_custom_call.1} parent=1 // pred_check
      _
    $region39: #{tpu_custom_call.1} parent=1 // pred_check_branch
      %97 = sbr.rel (0) target = $region41
    $region40: #{tpu_custom_call.1} parent=1 // pred_region
      _
    $region41: #{tpu_custom_call.1} parent=1 // pred_fallthru
      _
    // Predicated region
    $region42: #{tpu_custom_call.1} parent=1 // pred_check
      _
    $region43: #{tpu_custom_call.1} parent=1 // pred_check_branch
      %99 = sbr.rel (0) target = $region45
    $region44: #{tpu_custom_call.1} parent=1 // pred_region
      _
    $region45: #{tpu_custom_call.1} parent=1 // pred_fallthru
      _
    // Predicated region
    $region46: #{tpu_custom_call.1} parent=1 // pred_check
      _
    $region47: #{tpu_custom_call.1} parent=1 // pred_check_branch
      %101 = sbr.rel (0) target = $region49
    $region48: #{tpu_custom_call.1} parent=1 // pred_region
      _
    $region49: #{tpu_custom_call.1} parent=1 // pred_fallthru
      _
    // Predicated region
    $region50: #{tpu_custom_call.1} parent=1 // pred_check
      _
    $region51: #{tpu_custom_call.1} parent=1 // pred_check_branch
      %103 = sbr.rel (0) target = $region53
    $region52: #{tpu_custom_call.1} parent=1 // pred_region
      %105 = dma.done [#allocation6], 256
    $region53: #{tpu_custom_call.1} parent=1 // pred_fallthru
      _
    // Predicated region
    $region54: #{tpu_custom_call.1} parent=1 // pred_check
      _
    $region55: #{tpu_custom_call.1} parent=1 // pred_check_branch
      %107 = sbr.rel (0) target = $region57
    $region56: #{tpu_custom_call.1} parent=1 // pred_region
      %109 = dma.done [#allocation9], 256
    $region57: #{tpu_custom_call.1} parent=1 // pred_fallthru
      _
    // Predicated region
    $region58: #{tpu_custom_call.1} parent=1 // pred_check
      _
    $region59: #{tpu_custom_call.1} parent=1 // pred_check_branch
      %111 = sbr.rel (0) target = $region61
    $region60: #{tpu_custom_call.1} parent=1 // pred_region
      %113 = dma.done [#allocation9], 1024
    $region61: #{tpu_custom_call.1} parent=1 // pred_fallthru
      _
    // Predicated region
    $region62: #{tpu_custom_call.1} parent=1 // pred_check
      _
    $region63: #{tpu_custom_call.1} parent=1 // pred_check_branch
      %115 = sbr.rel (0) target = $region65
    $region64: #{tpu_custom_call.1} parent=1 // pred_region
      %117 = dma.done [#allocation12], 256
    $region65: #{tpu_custom_call.1} parent=1 // pred_fallthru
      _
    %v119 = vld [vmem:[#allocation5] sm:$0xff]
    %v120 = vld [vmem:[#allocation5 + $0x8] sm:$0xff]
    %v121 = vpack.c.bf16 %v120, %v119
    %v122 = vld [vmem:[%s2] sm:$0xf]
    %v123 = vld [vmem:[%s2 + $0x4] sm:$0xf]
    %v124 = vld [vmem:[%s2 + $0x8] sm:$0xf]
    %v125 = vld [vmem:[%s2 + $0xc] sm:$0xf]
    %v126 = vld [vmem:[%s2 + $0x10] sm:$0xf]
    %v127 = vld [vmem:[%s2 + $0x14] sm:$0x3]
    %v128 = vld [vmem:[%s3] sm:$0x1]
    %v130 = vperm.slane %v128, 0
    %v138 = vunpack.c.l.b16 %v122
    %v139 = vunpack.c.l.b16 %v123
    %v140 = vunpack.c.l.b16 %v124
    %v141 = vunpack.c.l.b16 %v125
    %v142 = vunpack.c.l.b16 %v126
    %v143 = vunpack.c.l.b16 %v127
    %v144 = vpack.c.b16 %v139, %v138
    %v145 = vpack.c.b16 %v141, %v140
    %v146 = vpack.c.b16 %v143, %v142
    %vm149 = vcmask 351232
    %v151 = vsel %vm149, %v121, 0
    %vm153 = vcmask 1044480
    %vm154 = vcmask 1045504
    %v155 = vsel %vm153, 4294967295, 65535
    %v156 = vsel %vm154, %v155, 0
    %v158 = vand.u32 %v146, %v156
    %160 = vmatpush.bf16.msra.mxu0 0
    %161 = vmatpush.bf16.msra.mxu0 0
    %162 = vmatpush.bf16.msra.mxu0 0
    %163 = vmatpush.bf16.msra.mxu0 0
    %164 = vmatpush.bf16.msra.mxu0 0
    %165 = vmatpush.bf16.msra.mxu0 %v158
    %166 = vmatpush.bf16.msra.mxu0 %v145
    %167 = vmatpush.bf16.msra.mxu0 %v144
    %168 = vmatmul.bf16.gmra.mxu0 %v151
    %v169 = vpop.f32.mrf.mxu0
    %v170 = vadd.f32 %v130, %v169
    %v171 = vpop.f32.mrf.mxu0
    %v172 = vadd.f32 %v130, %v171
    %173 = vdwg.mxu0
    %v174 = vmax.f32 %v170, 0.0
    %v175 = vmax.f32 %v172, 0.0
    %v176 = vpack.c.bf16 %v175, %v174
    %v177 = vld [vmem:[%s4] sm:$0xf]
    %v178 = vld [vmem:[%s4 + $0x4] sm:$0xf]
    %v179 = vld [vmem:[%s4 + $0x8] sm:$0xf]
    %v180 = vld [vmem:[%s4 + $0xc] sm:$0xf]
    %v181 = vld [vmem:[%s4 + $0x10] sm:$0xf]
    %v182 = vld [vmem:[%s4 + $0x14] sm:$0xf]
    %v183 = vld [vmem:[%s4 + $0x18] sm:$0xf]
    %v184 = vld [vmem:[%s5] sm:$0x1]
    %v186 = vperm.slane %v184, 0
    %v195 = vunpack.c.l.b16 %v177
    %v196 = vunpack.c.l.b16 %v178
    %v197 = vunpack.c.l.b16 %v179
    %v198 = vunpack.c.l.b16 %v180
    %v199 = vunpack.c.l.b16 %v181
    %v200 = vunpack.c.l.b16 %v182
    %v201 = vunpack.c.l.b16 %v183
    %v202 = vpack.c.b16 %v196, %v195
    %v203 = vpack.c.b16 %v198, %v197
    %v204 = vpack.c.b16 %v200, %v199
    %v205 = vpack.c.b16 %v201, %v201
    %vm209 = vcmask 457728
    %v211 = vsel %vm209, %v176, 0
    %vm213 = vcmask 1043456
    %v215 = vsel %vm213, %v205, 0
    %217 = vmatpush.bf16.msra.mxu0 0
    %218 = vmatpush.bf16.msra.mxu0 0
    %219 = vmatpush.bf16.msra.mxu0 0
    %220 = vmatpush.bf16.msra.mxu0 0
    %221 = vmatpush.bf16.msra.mxu0 %v215
    %222 = vmatpush.bf16.msra.mxu0 %v204
    %223 = vmatpush.bf16.msra.mxu0 %v203
    %224 = vmatpush.bf16.msra.mxu0 %v202
    %225 = vmatmul.bf16.gmra.mxu0 %v211
    %v226 = vpop.f32.mrf.mxu0
    %v227 = vadd.f32 %v186, %v226
    %v228 = vpop.f32.mrf.mxu0
    %v229 = vadd.f32 %v186, %v228
    %230 = vdwg.mxu0
    %s231 = sld [smem:[#allocation4]]
    %s232 = scalar_lea.vmem [#allocation8], %s231
    %v233 = vld [vmem:[%s232] sm:$0x1]
    %s234 = sld [smem:[#allocation4 + $0x1]]
    %s235 = scalar_lea.vmem [#allocation8], %s234
    %v236 = vld [vmem:[%s235] sm:$0x1]
    %s237 = sld [smem:[#allocation4 + $0x2]]
    %s238 = scalar_lea.vmem [#allocation8], %s237
    %v239 = vld [vmem:[%s238] sm:$0x1]
    %s240 = sld [smem:[#allocation4 + $0x3]]
    %s241 = scalar_lea.vmem [#allocation8], %s240
    %v242 = vld [vmem:[%s241] sm:$0x1]
    %s243 = sld [smem:[#allocation4 + $0x4]]
    %s244 = scalar_lea.vmem [#allocation8], %s243
    %v245 = vld [vmem:[%s244] sm:$0x1]
    %s246 = sld [smem:[#allocation4 + $0x5]]
    %s247 = scalar_lea.vmem [#allocation8], %s246
    %v248 = vld [vmem:[%s247] sm:$0x1]
    %s249 = sld [smem:[#allocation4 + $0x6]]
    %s250 = scalar_lea.vmem [#allocation8], %s249
    %v251 = vld [vmem:[%s250] sm:$0x1]
    %s252 = sld [smem:[#allocation4 + $0x7]]
    %s253 = scalar_lea.vmem [#allocation8], %s252
    %v254 = vld [vmem:[%s253] sm:$0x1]
    %s255 = sld [smem:[#allocation4 + $0x80]]
    %s256 = scalar_lea.vmem [#allocation8], %s255
    %v257 = vld [vmem:[%s256] sm:$0x1]
    %s258 = sld [smem:[#allocation4 + $0x81]]
    %s259 = scalar_lea.vmem [#allocation8], %s258
    %v260 = vld [vmem:[%s259] sm:$0x1]
    %s261 = sld [smem:[#allocation4 + $0x82]]
    %s262 = scalar_lea.vmem [#allocation8], %s261
    %v263 = vld [vmem:[%s262] sm:$0x1]
    %s264 = sld [smem:[#allocation4 + $0x83]]
    %s265 = scalar_lea.vmem [#allocation8], %s264
    %v266 = vld [vmem:[%s265] sm:$0x1]
    %s267 = sld [smem:[#allocation4 + $0x84]]
    %s268 = scalar_lea.vmem [#allocation8], %s267
    %v269 = vld [vmem:[%s268] sm:$0x1]
    %s270 = sld [smem:[#allocation4 + $0x85]]
    %s271 = scalar_lea.vmem [#allocation8], %s270
    %v272 = vld [vmem:[%s271] sm:$0x1]
    %s273 = sld [smem:[#allocation4 + $0x86]]
    %s274 = scalar_lea.vmem [#allocation8], %s273
    %v275 = vld [vmem:[%s274] sm:$0x1]
    %s276 = sld [smem:[#allocation4 + $0x87]]
    %s277 = scalar_lea.vmem [#allocation8], %s276
    %v278 = vld [vmem:[%s277] sm:$0x1]
    %v280 = vrot.slane %v236, 7
    %v283 = vrot.slane %v239, 6
    %v286 = vrot.slane %v242, 5
    %v289 = vrot.slane %v245, 4
    %v292 = vrot.slane %v248, 3
    %v295 = vrot.slane %v251, 2
    %v298 = vrot.slane %v254, 1
    %v301 = vrot.slane %v260, 7
    %v304 = vrot.slane %v263, 6
    %v307 = vrot.slane %v266, 5
    %v310 = vrot.slane %v269, 4
    %v313 = vrot.slane %v272, 3
    %v316 = vrot.slane %v275, 2
    %v319 = vrot.slane %v278, 1
    %vm321 = vcmask 1040384
    %v322 = vsel %vm321, %v233, %v280
    %vm323 = vcmask 1041408
    %v324 = vsel %vm323, %v322, %v283
    %vm325 = vcmask 1042432
    %v326 = vsel %vm325, %v324, %v286
    %v327 = vsel %vm213, %v326, %v289
    %v328 = vsel %vm153, %v327, %v292
    %v329 = vsel %vm154, %v328, %v295
    %vm330 = vcmask 1046528
    %v331 = vsel %vm330, %v329, %v298
    %v332 = vsel %vm321, %v257, %v301
    %v333 = vsel %vm323, %v332, %v304
    %v334 = vsel %vm325, %v333, %v307
    %v335 = vsel %vm213, %v334, %v310
    %v336 = vsel %vm153, %v335, %v313
    %v337 = vsel %vm154, %v336, %v316
    %v338 = vsel %vm330, %v337, %v319
    %v339 = vadd.f32 %v227, %v331
    %v340 = vadd.f32 %v229, %v338
    %v341 = vrot.slane %v339, 4
    %vm342 = vcmask 1047556
    %v343 = vsel %vm342, 0.0, %v341
    %v345 = vunpack.c.l.s4 1983009808
    %v346 = vunpack.c.0.s8 %v345
    %v347 = vperm.slane %v339, %v346
    %v349 = vunpack.c.l.s4 1983009808
    %v350 = vunpack.c.0.s8 %v349
    %v351 = vperm.slane %v343, %v350
    %v352 = vrot.slane %v340, 4
    %v353 = vsel %vm342, 0.0, %v352
    %v355 = vunpack.c.l.s4 1983009808
    %v356 = vunpack.c.0.s8 %v355
    %v357 = vperm.slane %v340, %v356
    %v359 = vunpack.c.l.s4 1983009808
    %v360 = vunpack.c.0.s8 %v359
    %v361 = vperm.slane %v353, %v360
    %v362 = vrot.slane %v357, 4
    %v363 = vsel %vm342, %v362, %v347
    %v364 = vrot.slane %v347, 4
    %v365 = vsel %vm342, %v357, %v364
    %v367 = vunpack.c.l.s4 1934713408
    %v368 = vunpack.c.0.s8 %v367
    %v369 = vperm.slane %v363, %v368
    %v371 = vunpack.c.l.s4 1934713408
    %v372 = vunpack.c.0.s8 %v371
    %v373 = vperm.slane %v365, %v372
    %v374 = vrot.slane %v361, 4
    %v375 = vsel %vm342, %v374, %v351
    %v376 = vrot.slane %v351, 4
    %v377 = vsel %vm342, %v361, %v376
    %v379 = vunpack.c.l.s4 1934713408
    %v380 = vunpack.c.0.s8 %v379
    %v381 = vperm.slane %v375, %v380
    %v383 = vunpack.c.l.s4 1934713408
    %v384 = vunpack.c.0.s8 %v383
    %v385 = vperm.slane %v377, %v384
    %v386 = vrot.slane %v369, 4
    %v387 = vsel %vm342, 0.0, %v386
    %v388 = vrot.slane %v373, 4
    %v389 = vsel %vm342, 0.0, %v388
    %v390 = vrot.slane %v381, 4
    %v391 = vsel %vm342, 0.0, %v390
    %v392 = vrot.slane %v385, 4
    %v393 = vsel %vm342, 0.0, %v392
    %394 = vst [vmem:[#allocation2] sm:$0x3] %v369
    %395 = vst [vmem:[#allocation2 + $0x2] sm:$0x3] %v387
    %396 = vst [vmem:[#allocation2 + $0x4] sm:$0x3] %v373
    %397 = vst [vmem:[#allocation2 + $0x6] sm:$0x3] %v389
    %398 = vst [vmem:[#allocation2 + $0x8] sm:$0x3] %v381
    %399 = vst [vmem:[#allocation2 + $0xa] sm:$0x3] %v391
    %400 = vst [vmem:[#allocation2 + $0xc] sm:$0x3] %v385
    %401 = vst [vmem:[#allocation2 + $0xe] sm:$0x3] %v393
    %v402 = vlaneseq
    %v403 = vand.u32 %v402, 127
    %vm404 = vcmp.ge.s32.totalorder %v403, 64
    %vm405 = vcmp.lt.s32.totalorder %v403, 96
    %vm406 = vmand %vm404, %vm405
    %v407 = vsel %vm406, 1.0, 0.5
    %v408 = vld [vmem:[#allocation10] sm:$0xff]
    %v409 = vld [vmem:[#allocation10 + $0x8] sm:$0xff]
    %v410 = vld [vmem:[#allocation10 + $0x10] sm:$0xff]
    %v411 = vld [vmem:[#allocation10 + $0x18] sm:$0xff]
    %v412 = vld [vmem:[#allocation10 + $0x20] sm:$0xff]
    %v413 = vld [vmem:[#allocation10 + $0x28] sm:$0xff]
    %v414 = vld [vmem:[#allocation10 + $0x30] sm:$0xff]
    %v415 = vld [vmem:[#allocation10 + $0x38] sm:$0xff]
    %v416 = vld [vmem:[%s8] sm:$0x1]
    %v417 = vld [vmem:[#allocation2] sm:$0x3]
    %v418 = vmul.f32 %v417, %v407
    %v419 = vtanh.pop %v418
    %v420 = vmul.f32 %v419, 0.5
    %v421 = vadd.f32 %v420, 0.5
    %v422 = vmul.f32 %v421, 0.0
    %424 = vrot.lane.b32.xlu0 %v419, 64
    %v425 = vpop.permute.xlu0 %424
    %v427 = vmul.f32 %v421, %v425
    %429 = vrot.lane.b32.xlu0 %v427, 32
    %v430 = vpop.permute.xlu0 %429
    %v432 = vadd.f32 %v422, %v430
    %v433 = vtanh.pop %v432
    %435 = vrot.lane.b32.xlu0 %v433, 64
    %v436 = vpop.permute.xlu0 %435
    %v438 = vmul.f32 %v421, %v436
    %440 = vrot.lane.b32.xlu0 %v438, 32
    %v441 = vpop.permute.xlu0 %440
    %vm443 = vcmask 261120
    %v444 = vsel %vm443, %v441, 0.0
    %v445 = vpack.c.bf16 %v444, %v444
    %v454 = vunpack.c.l.b16 %v408
    %v455 = vunpack.c.h.b16 %v408
    %v456 = vunpack.c.l.b16 %v409
    %v457 = vunpack.c.h.b16 %v409
    %v458 = vunpack.c.l.b16 %v410
    %v459 = vunpack.c.h.b16 %v410
    %v460 = vunpack.c.l.b16 %v411
    %v461 = vunpack.c.h.b16 %v411
    %v462 = vunpack.c.l.b16 %v412
    %v463 = vunpack.c.h.b16 %v412
    %v464 = vunpack.c.l.b16 %v413
    %v465 = vunpack.c.h.b16 %v413
    %v466 = vunpack.c.l.b16 %v414
    %v467 = vunpack.c.h.b16 %v414
    %v468 = vunpack.c.l.b16 %v415
    %v469 = vunpack.c.h.b16 %v415
    %v470 = vpack.c.b16 %v456, %v454
    %v471 = vpack.c.b16 %v457, %v455
    %v472 = vpack.c.b16 %v460, %v458
    %v473 = vpack.c.b16 %v461, %v459
    %v474 = vpack.c.b16 %v464, %v462
    %v475 = vpack.c.b16 %v465, %v463
    %v476 = vpack.c.b16 %v468, %v466
    %v477 = vpack.c.b16 %v469, %v467
    %vm486 = vcmask 523264
    %v488 = vsel %vm486, %v445, 0
    %490 = vmatpush.bf16.msra.mxu0 0
    %491 = vmatpush.bf16.msra.mxu0 0
    %492 = vmatpush.bf16.msra.mxu0 0
    %493 = vmatpush.bf16.msra.mxu0 0
    %494 = vmatpush.bf16.msra.mxu0 %v476
    %495 = vmatpush.bf16.msra.mxu0 %v474
    %496 = vmatpush.bf16.msra.mxu0 %v472
    %497 = vmatpush.bf16.msra.mxu0 %v470
    %498 = vmatmul.bf16.gmra.mxu0 %v488
    %v499 = vpop.f32.mrf.mxu0
    %v500 = vadd.f32 0.0, %v499
    %v501 = vpop.f32.mrf.mxu0
    %502 = vdwg.mxu0
    %503 = vmatpush.bf16.msra.mxu0 0
    %504 = vmatpush.bf16.msra.mxu0 0
    %505 = vmatpush.bf16.msra.mxu0 0
    %506 = vmatpush.bf16.msra.mxu0 0
    %507 = vmatpush.bf16.msra.mxu0 %v477
    %508 = vmatpush.bf16.msra.mxu0 %v475
    %509 = vmatpush.bf16.msra.mxu0 %v473
    %510 = vmatpush.bf16.msra.mxu0 %v471
    %511 = vmatmul.bf16.gmra.mxu0 %v488
    %v512 = vpop.f32.mrf.mxu0
    %v513 = vadd.f32 0.0, %v512
    %v514 = vpop.f32.mrf.mxu0
    %515 = vdwg.mxu0
    %s516 = scalar_lea.vmem [#allocation2], 2
    %v517 = vld [vmem:[%s516] sm:$0x3]
    %v518 = vadd.f32 %v500, %v517
    %v519 = vmul.f32 %v518, %v407
    %v520 = vtanh.pop %v519
    %v521 = vmul.f32 %v520, 0.5
    %v522 = vadd.f32 %v521, 0.5
    %v523 = vmul.f32 %v522, %v432
    %525 = vrot.lane.b32.xlu0 %v520, 64
    %v526 = vpop.permute.xlu0 %525
    %v528 = vmul.f32 %v522, %v526
    %530 = vrot.lane.b32.xlu0 %v528, 32
    %v531 = vpop.permute.xlu0 %530
    %v533 = vadd.f32 %v523, %v531
    %v534 = vtanh.pop %v533
    %536 = vrot.lane.b32.xlu0 %v534, 64
    %v537 = vpop.permute.xlu0 %536
    %v539 = vmul.f32 %v522, %v537
    %v541 = vperm.slane %v416, 0
    %v543 = vadd.f32 %v513, %v541
    %v544 = vmul.f32 %v543, %v407
    %v545 = vtanh.pop %v544
    %v546 = vmul.f32 %v545, 0.5
    %v547 = vadd.f32 %v546, 0.5
    %v548 = vmul.f32 %v547, 0.0
    %550 = vrot.lane.b32.xlu0 %v545, 64
    %v551 = vpop.permute.xlu0 %550
    %v553 = vmul.f32 %v547, %v551
    %555 = vrot.lane.b32.xlu0 %v553, 32
    %v556 = vpop.permute.xlu0 %555
    %v558 = vadd.f32 %v548, %v556
    %v559 = vtanh.pop %v558
    %561 = vrot.lane.b32.xlu0 %v559, 64
    %v562 = vpop.permute.xlu0 %561
    %v564 = vmul.f32 %v547, %v562
    %566 = vrot.lane.b32.xlu0 %v539, 32
    %v567 = vpop.permute.xlu0 %566
    %570 = vrot.lane.b32.xlu0 %v564, 64
    %v571 = vpop.permute.xlu0 %570
    %v573 = vsel %vm443, %v567, %v571
    %v574 = vpack.c.bf16 %v573, %v573
    %v576 = vsel %vm486, %v574, 0
    %578 = vmatpush.bf16.msra.mxu0 0
    %579 = vmatpush.bf16.msra.mxu0 0
    %580 = vmatpush.bf16.msra.mxu0 0
    %581 = vmatpush.bf16.msra.mxu0 0
    %582 = vmatpush.bf16.msra.mxu0 %v476
    %583 = vmatpush.bf16.msra.mxu0 %v474
    %584 = vmatpush.bf16.msra.mxu0 %v472
    %585 = vmatpush.bf16.msra.mxu0 %v470
    %586 = vmatmul.bf16.gmra.mxu0 %v576
    %v587 = vpop.f32.mrf.mxu0
    %v588 = vadd.f32 0.0, %v587
    %v589 = vpop.f32.mrf.mxu0
    %590 = vdwg.mxu0
    %591 = vmatpush.bf16.msra.mxu0 0
    %592 = vmatpush.bf16.msra.mxu0 0
    %593 = vmatpush.bf16.msra.mxu0 0
    %594 = vmatpush.bf16.msra.mxu0 0
    %595 = vmatpush.bf16.msra.mxu0 %v477
    %596 = vmatpush.bf16.msra.mxu0 %v475
    %597 = vmatpush.bf16.msra.mxu0 %v473
    %598 = vmatpush.bf16.msra.mxu0 %v471
    %599 = vmatmul.bf16.gmra.mxu0 %v576
    %v600 = vpop.f32.mrf.mxu0
    %v601 = vadd.f32 0.0, %v600
    %v602 = vpop.f32.mrf.mxu0
    %603 = vdwg.mxu0
    %s604 = scalar_lea.vmem [#allocation2], 4
    %v605 = vld [vmem:[%s604] sm:$0x3]
    %v606 = vadd.f32 %v588, %v605
    %v607 = vmul.f32 %v606, %v407
    %v608 = vtanh.pop %v607
    %v609 = vmul.f32 %v608, 0.5
    %v610 = vadd.f32 %v609, 0.5
    %v611 = vmul.f32 %v610, %v533
    %613 = vrot.lane.b32.xlu0 %v608, 64
    %v614 = vpop.permute.xlu0 %613
    %v616 = vmul.f32 %v610, %v614
    %618 = vrot.lane.b32.xlu0 %v616, 32
    %v619 = vpop.permute.xlu0 %618
    %v621 = vadd.f32 %v611, %v619
    %v622 = vtanh.pop %v621
    %624 = vrot.lane.b32.xlu0 %v622, 64
    %v625 = vpop.permute.xlu0 %624
    %v627 = vmul.f32 %v610, %v625
    %v628 = vadd.f32 %v601, %v541
    %v629 = vmul.f32 %v628, %v407
    %v630 = vtanh.pop %v629
    %v631 = vmul.f32 %v630, 0.5
    %v632 = vadd.f32 %v631, 0.5
    %v633 = vmul.f32 %v632, %v558
    %635 = vrot.lane.b32.xlu0 %v630, 64
    %v636 = vpop.permute.xlu0 %635
    %v638 = vmul.f32 %v632, %v636
    %640 = vrot.lane.b32.xlu0 %v638, 32
    %v641 = vpop.permute.xlu0 %640
    %v643 = vadd.f32 %v633, %v641
    %v644 = vtanh.pop %v643
    %646 = vrot.lane.b32.xlu0 %v644, 64
    %v647 = vpop.permute.xlu0 %646
    %v649 = vmul.f32 %v632, %v647
    %651 = vrot.lane.b32.xlu0 %v627, 32
    %v652 = vpop.permute.xlu0 %651
    %655 = vrot.lane.b32.xlu0 %v649, 64
    %v656 = vpop.permute.xlu0 %655
    %v658 = vsel %vm443, %v652, %v656
    %v659 = vpack.c.bf16 %v658, %v658
    %v661 = vsel %vm486, %v659, 0
    %663 = vmatpush.bf16.msra.mxu0 0
    %664 = vmatpush.bf16.msra.mxu0 0
    %665 = vmatpush.bf16.msra.mxu0 0
    %666 = vmatpush.bf16.msra.mxu0 0
    %667 = vmatpush.bf16.msra.mxu0 %v476
    %668 = vmatpush.bf16.msra.mxu0 %v474
    %669 = vmatpush.bf16.msra.mxu0 %v472
    %670 = vmatpush.bf16.msra.mxu0 %v470
    %671 = vmatmul.bf16.gmra.mxu0 %v661
    %v672 = vpop.f32.mrf.mxu0
    %v673 = vadd.f32 0.0, %v672
    %v674 = vpop.f32.mrf.mxu0
    %675 = vdwg.mxu0
    %676 = vmatpush.bf16.msra.mxu0 0
    %677 = vmatpush.bf16.msra.mxu0 0
    %678 = vmatpush.bf16.msra.mxu0 0
    %679 = vmatpush.bf16.msra.mxu0 0
    %680 = vmatpush.bf16.msra.mxu0 %v477
    %681 = vmatpush.bf16.msra.mxu0 %v475
    %682 = vmatpush.bf16.msra.mxu0 %v473
    %683 = vmatpush.bf16.msra.mxu0 %v471
    %684 = vmatmul.bf16.gmra.mxu0 %v661
    %v685 = vpop.f32.mrf.mxu0
    %v686 = vadd.f32 0.0, %v685
    %v687 = vpop.f32.mrf.mxu0
    %688 = vdwg.mxu0
    %s689 = scalar_lea.vmem [#allocation2], 6
    %v690 = vld [vmem:[%s689] sm:$0x3]
    %v691 = vadd.f32 %v673, %v690
    %v692 = vmul.f32 %v691, %v407
    %v693 = vtanh.pop %v692
    %v694 = vmul.f32 %v693, 0.5
    %v695 = vadd.f32 %v694, 0.5
    %v696 = vmul.f32 %v695, %v621
    %698 = vrot.lane.b32.xlu0 %v693, 64
    %v699 = vpop.permute.xlu0 %698
    %v701 = vmul.f32 %v695, %v699
    %703 = vrot.lane.b32.xlu0 %v701, 32
    %v704 = vpop.permute.xlu0 %703
    %v706 = vadd.f32 %v696, %v704
    %v707 = vtanh.pop %v706
    %709 = vrot.lane.b32.xlu0 %v707, 64
    %v710 = vpop.permute.xlu0 %709
    %v712 = vmul.f32 %v695, %v710
    %v713 = vadd.f32 %v686, %v541
    %v714 = vmul.f32 %v713, %v407
    %v715 = vtanh.pop %v714
    %v716 = vmul.f32 %v715, 0.5
    %v717 = vadd.f32 %v716, 0.5
    %v718 = vmul.f32 %v717, %v643
    %720 = vrot.lane.b32.xlu0 %v715, 64
    %v721 = vpop.permute.xlu0 %720
    %v723 = vmul.f32 %v717, %v721
    %725 = vrot.lane.b32.xlu0 %v723, 32
    %v726 = vpop.permute.xlu0 %725
    %v728 = vadd.f32 %v718, %v726
    %v729 = vtanh.pop %v728
    %731 = vrot.lane.b32.xlu0 %v729, 64
    %v732 = vpop.permute.xlu0 %731
    %v734 = vmul.f32 %v717, %v732
    %736 = vrot.lane.b32.xlu0 %v712, 32
    %v737 = vpop.permute.xlu0 %736
    %740 = vrot.lane.b32.xlu0 %v734, 64
    %v741 = vpop.permute.xlu0 %740
    %v743 = vsel %vm443, %v737, %v741
    %v744 = vpack.c.bf16 %v743, %v743
    %v746 = vsel %vm486, %v744, 0
    %748 = vmatpush.bf16.msra.mxu0 0
    %749 = vmatpush.bf16.msra.mxu0 0
    %750 = vmatpush.bf16.msra.mxu0 0
    %751 = vmatpush.bf16.msra.mxu0 0
    %752 = vmatpush.bf16.msra.mxu0 %v476
    %753 = vmatpush.bf16.msra.mxu0 %v474
    %754 = vmatpush.bf16.msra.mxu0 %v472
    %755 = vmatpush.bf16.msra.mxu0 %v470
    %756 = vmatmul.bf16.gmra.mxu0 %v746
    %v757 = vpop.f32.mrf.mxu0
    %v758 = vadd.f32 0.0, %v757
    %v759 = vpop.f32.mrf.mxu0
    %760 = vdwg.mxu0
    %761 = vmatpush.bf16.msra.mxu0 0
    %762 = vmatpush.bf16.msra.mxu0 0
    %763 = vmatpush.bf16.msra.mxu0 0
    %764 = vmatpush.bf16.msra.mxu0 0
    %765 = vmatpush.bf16.msra.mxu0 %v477
    %766 = vmatpush.bf16.msra.mxu0 %v475
    %767 = vmatpush.bf16.msra.mxu0 %v473
    %768 = vmatpush.bf16.msra.mxu0 %v471
    %769 = vmatmul.bf16.gmra.mxu0 %v746
    %v770 = vpop.f32.mrf.mxu0
    %v771 = vadd.f32 0.0, %v770
    %v772 = vpop.f32.mrf.mxu0
    %773 = vdwg.mxu0
    %s774 = scalar_lea.vmem [#allocation2], 8
    %v775 = vld [vmem:[%s774] sm:$0x3]
    %v776 = vadd.f32 %v758, %v775
    %v777 = vmul.f32 %v776, %v407
    %v778 = vtanh.pop %v777
    %v779 = vmul.f32 %v778, 0.5
    %v780 = vadd.f32 %v779, 0.5
    %v781 = vmul.f32 %v780, %v706
    %783 = vrot.lane.b32.xlu0 %v778, 64
    %v784 = vpop.permute.xlu0 %783
    %v786 = vmul.f32 %v780, %v784
    %788 = vrot.lane.b32.xlu0 %v786, 32
    %v789 = vpop.permute.xlu0 %788
    %v791 = vadd.f32 %v781, %v789
    %v792 = vtanh.pop %v791
    %794 = vrot.lane.b32.xlu0 %v792, 64
    %v795 = vpop.permute.xlu0 %794
    %v797 = vmul.f32 %v780, %v795
    %v798 = vadd.f32 %v771, %v541
    %v799 = vmul.f32 %v798, %v407
    %v800 = vtanh.pop %v799
    %v801 = vmul.f32 %v800, 0.5
    %v802 = vadd.f32 %v801, 0.5
    %v803 = vmul.f32 %v802, %v728
    %805 = vrot.lane.b32.xlu0 %v800, 64
    %v806 = vpop.permute.xlu0 %805
    %v808 = vmul.f32 %v802, %v806
    %810 = vrot.lane.b32.xlu0 %v808, 32
    %v811 = vpop.permute.xlu0 %810
    %v813 = vadd.f32 %v803, %v811
    %v814 = vtanh.pop %v813
    %816 = vrot.lane.b32.xlu0 %v814, 64
    %v817 = vpop.permute.xlu0 %816
    %v819 = vmul.f32 %v802, %v817
    %821 = vrot.lane.b32.xlu0 %v797, 32
    %v822 = vpop.permute.xlu0 %821
    %825 = vrot.lane.b32.xlu0 %v819, 64
    %v826 = vpop.permute.xlu0 %825
    %v828 = vsel %vm443, %v822, %v826
    %v829 = vpack.c.bf16 %v828, %v828
    %v831 = vsel %vm486, %v829, 0
    %833 = vmatpush.bf16.msra.mxu0 0
    %834 = vmatpush.bf16.msra.mxu0 0
    %835 = vmatpush.bf16.msra.mxu0 0
    %836 = vmatpush.bf16.msra.mxu0 0
    %837 = vmatpush.bf16.msra.mxu0 %v476
    %838 = vmatpush.bf16.msra.mxu0 %v474
    %839 = vmatpush.bf16.msra.mxu0 %v472
    %840 = vmatpush.bf16.msra.mxu0 %v470
    %841 = vmatmul.bf16.gmra.mxu0 %v831
    %v842 = vpop.f32.mrf.mxu0
    %v843 = vadd.f32 0.0, %v842
    %v844 = vpop.f32.mrf.mxu0
    %845 = vdwg.mxu0
    %846 = vmatpush.bf16.msra.mxu0 0
    %847 = vmatpush.bf16.msra.mxu0 0
    %848 = vmatpush.bf16.msra.mxu0 0
    %849 = vmatpush.bf16.msra.mxu0 0
    %850 = vmatpush.bf16.msra.mxu0 %v477
    %851 = vmatpush.bf16.msra.mxu0 %v475
    %852 = vmatpush.bf16.msra.mxu0 %v473
    %853 = vmatpush.bf16.msra.mxu0 %v471
    %854 = vmatmul.bf16.gmra.mxu0 %v831
    %v855 = vpop.f32.mrf.mxu0
    %v856 = vadd.f32 0.0, %v855
    %v857 = vpop.f32.mrf.mxu0
    %858 = vdwg.mxu0
    %s859 = scalar_lea.vmem [#allocation2], 10
    %v860 = vld [vmem:[%s859] sm:$0x3]
    %v861 = vadd.f32 %v843, %v860
    %v862 = vmul.f32 %v861, %v407
    %v863 = vtanh.pop %v862
    %v864 = vmul.f32 %v863, 0.5
    %v865 = vadd.f32 %v864, 0.5
    %v866 = vmul.f32 %v865, %v791
    %868 = vrot.lane.b32.xlu0 %v863, 64
    %v869 = vpop.permute.xlu0 %868
    %v871 = vmul.f32 %v865, %v869
    %873 = vrot.lane.b32.xlu0 %v871, 32
    %v874 = vpop.permute.xlu0 %873
    %v876 = vadd.f32 %v866, %v874
    %v877 = vtanh.pop %v876
    %879 = vrot.lane.b32.xlu0 %v877, 64
    %v880 = vpop.permute.xlu0 %879
    %v882 = vmul.f32 %v865, %v880
    %v883 = vadd.f32 %v856, %v541
    %v884 = vmul.f32 %v883, %v407
    %v885 = vtanh.pop %v884
    %v886 = vmul.f32 %v885, 0.5
    %v887 = vadd.f32 %v886, 0.5
    %v888 = vmul.f32 %v887, %v813
    %890 = vrot.lane.b32.xlu0 %v885, 64
    %v891 = vpop.permute.xlu0 %890
    %v893 = vmul.f32 %v887, %v891
    %895 = vrot.lane.b32.xlu0 %v893, 32
    %v896 = vpop.permute.xlu0 %895
    %v898 = vadd.f32 %v888, %v896
    %v899 = vtanh.pop %v898
    %901 = vrot.lane.b32.xlu0 %v899, 64
    %v902 = vpop.permute.xlu0 %901
    %v904 = vmul.f32 %v887, %v902
    %906 = vrot.lane.b32.xlu0 %v882, 32
    %v907 = vpop.permute.xlu0 %906
    %910 = vrot.lane.b32.xlu0 %v904, 64
    %v911 = vpop.permute.xlu0 %910
    %v913 = vsel %vm443, %v907, %v911
    %v914 = vpack.c.bf16 %v913, %v913
    %v916 = vsel %vm486, %v914, 0
    %918 = vmatpush.bf16.msra.mxu0 0
    %919 = vmatpush.bf16.msra.mxu0 0
    %920 = vmatpush.bf16.msra.mxu0 0
    %921 = vmatpush.bf16.msra.mxu0 0
    %922 = vmatpush.bf16.msra.mxu0 %v476
    %923 = vmatpush.bf16.msra.mxu0 %v474
    %924 = vmatpush.bf16.msra.mxu0 %v472
    %925 = vmatpush.bf16.msra.mxu0 %v470
    %926 = vmatmul.bf16.gmra.mxu0 %v916
    %v927 = vpop.f32.mrf.mxu0
    %v928 = vadd.f32 0.0, %v927
    %v929 = vpop.f32.mrf.mxu0
    %930 = vdwg.mxu0
    %931 = vmatpush.bf16.msra.mxu0 0
    %932 = vmatpush.bf16.msra.mxu0 0
    %933 = vmatpush.bf16.msra.mxu0 0
    %934 = vmatpush.bf16.msra.mxu0 0
    %935 = vmatpush.bf16.msra.mxu0 %v477
    %936 = vmatpush.bf16.msra.mxu0 %v475
    %937 = vmatpush.bf16.msra.mxu0 %v473
    %938 = vmatpush.bf16.msra.mxu0 %v471
    %939 = vmatmul.bf16.gmra.mxu0 %v916
    %v940 = vpop.f32.mrf.mxu0
    %v941 = vadd.f32 0.0, %v940
    %v942 = vpop.f32.mrf.mxu0
    %943 = vdwg.mxu0
    %s944 = scalar_lea.vmem [#allocation2], 12
    %v945 = vld [vmem:[%s944] sm:$0x3]
    %v946 = vadd.f32 %v928, %v945
    %v947 = vmul.f32 %v946, %v407
    %v948 = vtanh.pop %v947
    %v949 = vmul.f32 %v948, 0.5
    %v950 = vadd.f32 %v949, 0.5
    %v951 = vmul.f32 %v950, %v876
    %953 = vrot.lane.b32.xlu0 %v948, 64
    %v954 = vpop.permute.xlu0 %953
    %v956 = vmul.f32 %v950, %v954
    %958 = vrot.lane.b32.xlu0 %v956, 32
    %v959 = vpop.permute.xlu0 %958
    %v961 = vadd.f32 %v951, %v959
    %v962 = vtanh.pop %v961
    %964 = vrot.lane.b32.xlu0 %v962, 64
    %v965 = vpop.permute.xlu0 %964
    %v967 = vmul.f32 %v950, %v965
    %v968 = vadd.f32 %v941, %v541
    %v969 = vmul.f32 %v968, %v407
    %v970 = vtanh.pop %v969
    %v971 = vmul.f32 %v970, 0.5
    %v972 = vadd.f32 %v971, 0.5
    %v973 = vmul.f32 %v972, %v898
    %975 = vrot.lane.b32.xlu0 %v970, 64
    %v976 = vpop.permute.xlu0 %975
    %v978 = vmul.f32 %v972, %v976
    %980 = vrot.lane.b32.xlu0 %v978, 32
    %v981 = vpop.permute.xlu0 %980
    %v983 = vadd.f32 %v973, %v981
    %v984 = vtanh.pop %v983
    %986 = vrot.lane.b32.xlu0 %v984, 64
    %v987 = vpop.permute.xlu0 %986
    %v989 = vmul.f32 %v972, %v987
    %991 = vrot.lane.b32.xlu0 %v967, 32
    %v992 = vpop.permute.xlu0 %991
    %995 = vrot.lane.b32.xlu0 %v989, 64
    %v996 = vpop.permute.xlu0 %995
    %v998 = vsel %vm443, %v992, %v996
    %v999 = vpack.c.bf16 %v998, %v998
    %v1001 = vsel %vm486, %v999, 0
    %1003 = vmatpush.bf16.msra.mxu0 0
    %1004 = vmatpush.bf16.msra.mxu0 0
    %1005 = vmatpush.bf16.msra.mxu0 0
    %1006 = vmatpush.bf16.msra.mxu0 0
    %1007 = vmatpush.bf16.msra.mxu0 %v476
    %1008 = vmatpush.bf16.msra.mxu0 %v474
    %1009 = vmatpush.bf16.msra.mxu0 %v472
    %1010 = vmatpush.bf16.msra.mxu0 %v470
    %1011 = vmatmul.bf16.gmra.mxu0 %v1001
    %v1012 = vpop.f32.mrf.mxu0
    %v1013 = vadd.f32 0.0, %v1012
    %v1014 = vpop.f32.mrf.mxu0
    %1015 = vdwg.mxu0
    %1016 = vmatpush.bf16.msra.mxu0 0
    %1017 = vmatpush.bf16.msra.mxu0 0
    %1018 = vmatpush.bf16.msra.mxu0 0
    %1019 = vmatpush.bf16.msra.mxu0 0
    %1020 = vmatpush.bf16.msra.mxu0 %v477
    %1021 = vmatpush.bf16.msra.mxu0 %v475
    %1022 = vmatpush.bf16.msra.mxu0 %v473
    %1023 = vmatpush.bf16.msra.mxu0 %v471
    %1024 = vmatmul.bf16.gmra.mxu0 %v1001
    %v1025 = vpop.f32.mrf.mxu0
    %v1026 = vadd.f32 0.0, %v1025
    %v1027 = vpop.f32.mrf.mxu0
    %1028 = vdwg.mxu0
    %s1029 = scalar_lea.vmem [#allocation2], 14
    %v1030 = vld [vmem:[%s1029] sm:$0x3]
    %v1031 = vadd.f32 %v1013, %v1030
    %v1032 = vmul.f32 %v1031, %v407
    %v1033 = vtanh.pop %v1032
    %v1034 = vmul.f32 %v1033, 0.5
    %v1035 = vadd.f32 %v1034, 0.5
    %v1036 = vmul.f32 %v1035, %v961
    %1038 = vrot.lane.b32.xlu0 %v1033, 64
    %v1039 = vpop.permute.xlu0 %1038
    %v1041 = vmul.f32 %v1035, %v1039
    %1043 = vrot.lane.b32.xlu0 %v1041, 32
    %v1044 = vpop.permute.xlu0 %1043
    %v1046 = vadd.f32 %v1036, %v1044
    %v1047 = vtanh.pop %v1046
    %1049 = vrot.lane.b32.xlu0 %v1047, 64
    %v1050 = vpop.permute.xlu0 %1049
    %v1052 = vmul.f32 %v1035, %v1050
    %v1053 = vadd.f32 %v1026, %v541
    %v1054 = vmul.f32 %v1053, %v407
    %v1055 = vtanh.pop %v1054
    %v1056 = vmul.f32 %v1055, 0.5
    %v1057 = vadd.f32 %v1056, 0.5
    %v1058 = vmul.f32 %v1057, %v983
    %1060 = vrot.lane.b32.xlu0 %v1055, 64
    %v1061 = vpop.permute.xlu0 %1060
    %v1063 = vmul.f32 %v1057, %v1061
    %1065 = vrot.lane.b32.xlu0 %v1063, 32
    %v1066 = vpop.permute.xlu0 %1065
    %v1068 = vadd.f32 %v1058, %v1066
    %v1069 = vtanh.pop %v1068
    %1071 = vrot.lane.b32.xlu0 %v1069, 64
    %v1072 = vpop.permute.xlu0 %1071
    %v1074 = vmul.f32 %v1057, %v1072
    %1076 = vrot.lane.b32.xlu0 %v1052, 32
    %v1077 = vpop.permute.xlu0 %1076
    %1080 = vrot.lane.b32.xlu0 %v1074, 64
    %v1081 = vpop.permute.xlu0 %1080
    %v1083 = vsel %vm443, %v1077, %v1081
    %v1084 = vpack.c.bf16 %v1083, %v1083
    %v1086 = vsel %vm486, %v1084, 0
    %1088 = vmatpush.bf16.msra.mxu0 0
    %1089 = vmatpush.bf16.msra.mxu0 0
    %1090 = vmatpush.bf16.msra.mxu0 0
    %1091 = vmatpush.bf16.msra.mxu0 0
    %1092 = vmatpush.bf16.msra.mxu0 %v477
    %1093 = vmatpush.bf16.msra.mxu0 %v475
    %1094 = vmatpush.bf16.msra.mxu0 %v473
    %1095 = vmatpush.bf16.msra.mxu0 %v471
    %1096 = vmatmul.bf16.gmra.mxu0 %v1086
    %v1097 = vpop.f32.mrf.mxu0
    %v1098 = vadd.f32 0.0, %v1097
    %v1099 = vpop.f32.mrf.mxu0
    %1100 = vdwg.mxu0
    %v1101 = vadd.f32 %v1098, %v541
    %v1102 = vmul.f32 %v1101, %v407
    %v1103 = vtanh.pop %v1102
    %v1104 = vmul.f32 %v1103, 0.5
    %v1105 = vadd.f32 %v1104, 0.5
    %v1106 = vmul.f32 %v1105, %v1068
    %1108 = vrot.lane.b32.xlu0 %v1103, 64
    %v1109 = vpop.permute.xlu0 %1108
    %v1111 = vmul.f32 %v1105, %v1109
    %1113 = vrot.lane.b32.xlu0 %v1111, 32
    %v1114 = vpop.permute.xlu0 %1113
    %v1116 = vadd.f32 %v1106, %v1114
    %v1117 = vtanh.pop %v1116
    %1119 = vrot.lane.b32.xlu0 %v1117, 64
    %v1120 = vpop.permute.xlu0 %1119
    %v1122 = vmul.f32 %v1105, %v1120
    %v1123 = vpack.c.bf16 %v1122, %v1122
    %v1124 = vld [vmem:[#allocation11] sm:$0xf]
    %v1125 = vld [vmem:[#allocation11 + $0x4] sm:$0xf]
    %v1126 = vld [vmem:[#allocation11 + $0x8] sm:$0xf]
    %v1127 = vld [vmem:[#allocation11 + $0xc] sm:$0xf]
    %v1128 = vld [vmem:[%s10] sm:$0x1]
    %v1130 = vperm.slane %v1128, 0
    %1133 = vrot.lane.b32.xlu0 %v1123, 32
    %v1134 = vpop.permute.xlu0 %1133
    %v1139 = vunpack.c.l.b16 %v1124
    %v1140 = vunpack.c.l.b16 %v1125
    %v1141 = vunpack.c.l.b16 %v1126
    %v1142 = vunpack.c.l.b16 %v1127
    %v1143 = vpack.c.b16 %v1140, %v1139
    %v1144 = vpack.c.b16 %v1142, %v1141
    %v1148 = vsel %vm443, %v1134, 0
    %1150 = vmatpush.bf16.msra.mxu0 0
    %1151 = vmatpush.bf16.msra.mxu0 0
    %1152 = vmatpush.bf16.msra.mxu0 0
    %1153 = vmatpush.bf16.msra.mxu0 0
    %1154 = vmatpush.bf16.msra.mxu0 0
    %1155 = vmatpush.bf16.msra.mxu0 0
    %1156 = vmatpush.bf16.msra.mxu0 %v1144
    %1157 = vmatpush.bf16.msra.mxu0 %v1143
    %1158 = vmatmul.bf16.gmra.mxu0 %v1148
    %v1159 = vpop.f32.mrf.mxu0
    %v1160 = vadd.f32 %v1130, %v1159
    %v1161 = vpop.f32.mrf.mxu0
    %1162 = vdwg.mxu0
    %v1163 = vmax.f32 %v1160, 0.0
    %v1164 = vpack.c.bf16 %v1163, %v1163
    %v1165 = vld [vmem:[%s11] sm:$0xf]
    %v1166 = vld [vmem:[%s11 + $0x4] sm:$0xf]
    %v1167 = vld [vmem:[%s11 + $0x8] sm:$0xf]
    %v1168 = vld [vmem:[%s11 + $0xc] sm:$0xf]
    %v1169 = vld [vmem:[%s11 + $0x10] sm:$0xf]
    %v1170 = vld [vmem:[%s11 + $0x14] sm:$0xf]
    %v1171 = vld [vmem:[%s11 + $0x18] sm:$0xf]
    %v1172 = vld [vmem:[%s11 + $0x1c] sm:$0xf]
    %v1173 = vld [vmem:[%s12] sm:$0x1]
    %v1175 = vperm.slane %v1173, 0
    %v1185 = vunpack.c.l.b16 %v1165
    %v1186 = vunpack.c.l.b16 %v1166
    %v1187 = vunpack.c.l.b16 %v1167
    %v1188 = vunpack.c.l.b16 %v1168
    %v1189 = vunpack.c.l.b16 %v1169
    %v1190 = vunpack.c.l.b16 %v1170
    %v1191 = vunpack.c.l.b16 %v1171
    %v1192 = vunpack.c.l.b16 %v1172
    %v1193 = vpack.c.b16 %v1186, %v1185
    %v1194 = vpack.c.b16 %v1188, %v1187
    %v1195 = vpack.c.b16 %v1190, %v1189
    %v1196 = vpack.c.b16 %v1192, %v1191
    %v1202 = vsel %vm486, %v1164, 0
    %1204 = vmatpush.bf16.msra.mxu0 0
    %1205 = vmatpush.bf16.msra.mxu0 0
    %1206 = vmatpush.bf16.msra.mxu0 0
    %1207 = vmatpush.bf16.msra.mxu0 0
    %1208 = vmatpush.bf16.msra.mxu0 %v1196
    %1209 = vmatpush.bf16.msra.mxu0 %v1195
    %1210 = vmatpush.bf16.msra.mxu0 %v1194
    %1211 = vmatpush.bf16.msra.mxu0 %v1193
    %1212 = vmatmul.bf16.gmra.mxu0 %v1202
    %v1213 = vpop.f32.mrf.mxu0
    %v1214 = vadd.f32 %v1175, %v1213
    %v1215 = vpop.f32.mrf.mxu0
    %1216 = vdwg.mxu0
    %vm1217 = vcmp.ge.s32.totalorder %v403, 35
    %v1218 = vmul.f32 %v1214, 0.5
    %v1219 = vtanh.pop %v1218
    %v1220 = vmul.f32 %v1219, 0.5
    %v1221 = vadd.f32 %v1220, 0.5
    %v1222 = vsel %vm1217, %v1221, %v1214
    %vm1223 = vcmask 345088
    %1224 = vst.msk [vmem:[#allocation13] sm:$0x3] %vm1223, %v1222
    %vm1225 = vcmask 254976
    %1226 = vst.msk [vmem:[#allocation14] sm:$0x3] %vm1225, %v1077
    %1228 = vrot.lane.b32.xlu0 %v1122, 32
    %v1229 = vpop.permute.xlu0 %1228
    %s1231 = scalar_lea.vmem [#allocation14], 2
    %1232 = vst.msk [vmem:[%s1231] sm:$0x3] %vm1225, %v1229
    %1234 = vrot.lane.b32.xlu0 %v1046, 96
    %v1235 = vpop.permute.xlu0 %1234
    %1237 = vst.msk [vmem:[#allocation16] sm:$0x3] %vm1225, %v1235
    %1239 = vrot.lane.b32.xlu0 %v1116, 96
    %v1240 = vpop.permute.xlu0 %1239
    %s1242 = scalar_lea.vmem [#allocation16], 2
    %1243 = vst.msk [vmem:[%s1242] sm:$0x3] %vm1225, %v1240
    // Predicated region
    $region66: #{tpu_custom_call.1} parent=1 // pred_check
      _
    $region67: #{tpu_custom_call.1} parent=1 // pred_check_branch
      %1245 = sbr.rel (0) target = $region69
    $region68: #{tpu_custom_call.1} parent=1 // pred_region
      %1247 = vsyncadd [#allocation7], 0
      %s1249 = sshll.u32 [#allocation13], 4
      %s1250 = int_to_ptr.vmem [resolvable:$true] %s1249
      %s1251 = sshll.u32 %s13, 4
      %s1252 = int_to_ptr.hbm [resolvable:$true] %s1251
      %1254 = dma.vmem_to_hbm [thread:$0]  %s1250, 32, %s1252, [#allocation7]
    $region69: #{tpu_custom_call.1} parent=1 // pred_fallthru
      _
    // Predicated region
    $region70: #{tpu_custom_call.1} parent=1 // pred_check
      _
    $region71: #{tpu_custom_call.1} parent=1 // pred_check_branch
      %1256 = sbr.rel (0) target = $region73
    $region72: #{tpu_custom_call.1} parent=1 // pred_region
      %1258 = vsyncadd [#allocation15], 0
      %s1259 = sshll.u32 [#allocation14], 4
      %s1260 = int_to_ptr.vmem [resolvable:$true] %s1259
      %s1261 = sshll.u32 %s14, 4
      %s1262 = int_to_ptr.hbm [resolvable:$true] %s1261
      %1267 = dma.vmem_to_hbm [thread:$0]  %s1260, 64, %s1262, [#allocation15], 32, 32, 2
    $region73: #{tpu_custom_call.1} parent=1 // pred_fallthru
      _
    // Predicated region
    $region74: #{tpu_custom_call.1} parent=1 // pred_check
      _
    $region75: #{tpu_custom_call.1} parent=1 // pred_check_branch
      %1269 = sbr.rel (0) target = $region77
    $region76: #{tpu_custom_call.1} parent=1 // pred_region
      %1271 = vsyncadd [#allocation15], 0
      %s1272 = sshll.u32 [#allocation16], 4
      %s1273 = int_to_ptr.vmem [resolvable:$true] %s1272
      %s1274 = sshll.u32 %s15, 4
      %s1275 = int_to_ptr.hbm [resolvable:$true] %s1274
      %1280 = dma.vmem_to_hbm [thread:$0]  %s1273, 64, %s1275, [#allocation15], 32, 32, 2
    $region77: #{tpu_custom_call.1} parent=1 // pred_fallthru
      _
    // Predicated region
    $region78: #{tpu_custom_call.1} parent=1 // pred_check
      _
    $region79: #{tpu_custom_call.1} parent=1 // pred_check_branch
      %1282 = sbr.rel (0) target = $region81
    $region80: #{tpu_custom_call.1} parent=1 // pred_region
      %1284 = dma.done [#allocation7], 32
    $region81: #{tpu_custom_call.1} parent=1 // pred_fallthru
      _
    // Predicated region
    $region82: #{tpu_custom_call.1} parent=1 // pred_check
      _
    $region83: #{tpu_custom_call.1} parent=1 // pred_check_branch
      %1286 = sbr.rel (0) target = $region85
    $region84: #{tpu_custom_call.1} parent=1 // pred_region
      %1288 = dma.done [#allocation15], 64
    $region85: #{tpu_custom_call.1} parent=1 // pred_fallthru
      _
    // Predicated region
    $region86: #{tpu_custom_call.1} parent=1 // pred_check
      _
    $region87: #{tpu_custom_call.1} parent=1 // pred_check_branch
      %1290 = sbr.rel (0) target = $region89
    $region88: #{tpu_custom_call.1} parent=1 // pred_region
      %1292 = dma.done [#allocation15], 64
    $region89: #{tpu_custom_call.1} parent=1 // pred_fallthru
      _
    %1293 = vsyncpa [#allocation6], 1
    %1294 = vsyncpa [#allocation9], 1
    %1295 = vsyncpa [#allocation12], 1
    %1296 = vsyncpa [#allocation7], 1
    %1297 = vsyncpa [#allocation15], 1

</llo_original>
